<compile_context>
chip_gen: v5e
topology: v5e:2x2
jax: 0.10.0
libtpu: 0.0.40
codegen_flags: <defaults>
</compile_context>

<pallas_src>
import jax
import jax.numpy as jnp
from jax import lax
from jax.experimental import pallas as pl
from jax.experimental.pallas import tpu as pltpu

# Fixed (non-trainable) Sobel kernels, exactly as in Sobelxy.__init__.
_KX = ((-1.0, 0.0, 1.0),
       (-2.0, 0.0, 2.0),
       (-1.0, 0.0, 1.0))
_KY = ((1.0, 2.0, 1.0),
       (0.0, 0.0, 0.0),
       (-1.0, -2.0, -1.0))


def _round_up(a, b):
    return ((a + b - 1) // b) * b


def _choose_tiles(h, wp, n, itemsize):
    """Pick strip height TH (multiple of 8), padded height HP and strip count nS."""
    hp8 = _round_up(h, 8)

    # Per-chip VMEM budget for (double-buffered inputs + live f32 slabs) per strip.
    try:
        vmem_phys = int(pltpu.get_tpu_info().vmem_capacity_bytes)
    except Exception:  # conservative fallback (v7x-sized)
        vmem_phys = 64 * 1024 * 1024
    budget = max(4 * 1024 * 1024, min(16 * 1024 * 1024, vmem_phys // 4))
    per_row = (6 * itemsize + 14 * 4) * wp          # 2x-buffered inputs + f32 temporaries
    cap = max(8, min(1024, (budget // per_row) // 8 * 8))

    # Keep at least ~4 grid steps so both v7x TensorCores get work (N * nS >= 4).
    want_strips = -(-4 // n)                        # ceil(4 / n)
    th_par = max(8, _round_up(-(-hp8 // want_strips), 8))

    th_max = max(8, min(cap, th_par, hp8))
    # Prefer a TH that divides ceil8(H): avoids the extra HBM pad pass entirely when
    # H is already a multiple of 8, and never falls off the old TH=8 cliff.
    th = th_max
    d = th_max
    while d >= max(8, th_max // 2):
        if hp8 % d == 0:
            th = d
            break
        d -= 8

    hp = _round_up(h, th)
    return th, hp, hp // th


def _make_kernel(th, wp, w, h, hp, n_strips):
    mask_rows = hp > h
    mask_cols = wp > w
    n_lane_groups = wp // 128

    def kernel(ac, ap, an, bc, bp, bn, fc, fp, fn, out_ref):
        s = pl.program_id(1)
        up_keep = (s > 0).astype(jnp.float32)                # zero halo above image row 0
        dn_keep = (s < n_strips - 1).astype(jnp.float32)     # zero halo below image bottom

        # Hoisted zero columns for the lane shifts (built once, shared by all images).
        z_th = jnp.zeros((th, 1), jnp.float32)
        z_1 = jnp.zeros((1, 1), jnp.float32)

        def lane_nbrs(x, z):
            # x[:, j-1] and x[:, j+1] with the conv's zero border on the outer lanes.
            xl = jnp.concatenate([z, x[:, :-1]], axis=1)
            xr = jnp.concatenate([x[:, 1:], z], axis=1)
            return xl, xr

        def grad(xc, xhp, xhn):
            """|sobel_x| + |sobel_y| split into (interior rows, first row, last row)."""
            x0 = xc[...].astype(jnp.float32)                      # (TH, WP)
            top = xhp[7:8, :].astype(jnp.float32) * up_keep       # row above the strip
            bot = xhn[0:1, :].astype(jnp.float32) * dn_keep       # row below the strip

            xl, xr = lane_nbrs(x0, z_th)
            hd = xr - xl                       # horizontal difference (feeds sobel-x)
            hs = xl + 2.0 * x0 + xr            # horizontal smooth     (feeds sobel-y)
            tl, tr = lane_nbrs(top, z_1)
            hd_t, hs_t = tr - tl, tl + 2.0 * top + tr
            bl, br = lane_nbrs(bot, z_1)
            hd_b, hs_b = br - bl, bl + 2.0 * bot + br

            # Interior output rows 1 .. TH-2 need no halo at all.
            g_int = (jnp.abs(hd[0:th - 2] + 2.0 * hd[1:th - 1] + hd[2:th])
                     + jnp.abs(hs[0:th - 2] - hs[2:th]))
            # First / last row of the strip use one halo row each.
            g_first = (jnp.abs(hd_t + 2.0 * hd[0:1] + hd[1:2])
                       + jnp.abs(hs_t - hs[1:2]))
            g_last = (jnp.abs(hd[th - 2:th - 1] + 2.0 * hd[th - 1:th] + hd_b)
                      + jnp.abs(hs[th - 2:th - 1] - hs_b))
            return g_int, g_first, g_last

        ga_i, ga_f, ga_l = grad(ac, ap, an)
        gb_i, gb_f, gb_l = grad(bc, bp, bn)
        gf_i, gf_f, gf_l = grad(fc, fp, fn)

        d_i = jnp.abs(gf_i - jnp.maximum(ga_i, gb_i))             # (TH-2, WP)
        d_f = jnp.abs(gf_f - jnp.maximum(ga_f, gb_f))             # (1, WP)
        d_l = jnp.abs(gf_l - jnp.maximum(ga_l, gb_l))             # (1, WP)

        if mask_rows:
            # Only the last strip can contain pad rows; a (TH-2, 1) keep-vector keeps
            # the cost near one multiply per pixel, and only when padding exists.
            r = lax.broadcasted_iota(jnp.int32, (th - 2, 1), 0)
            d_i = d_i * (s * th + 1 + r < h).astype(jnp.float32)
            d_l = d_l * ((s + 1) * th <= h).astype(jnp.float32)
            # The first row of a strip is always a valid image row.

        row_sum = jnp.sum(d_i, axis=0, keepdims=True) + d_f + d_l  # (1, WP)

        if mask_cols:
            c = lax.broadcasted_iota(jnp.int32, (1, wp), 1)
            row_sum = row_sum * (c < w).astype(jnp.float32)

        # Fold lanes down to one lane-dense 128-wide partial-sum row.
        acc = row_sum[:, 0:128]
        for j in range(1, n_lane_groups):
            acc = acc + row_sum[:, 128 * j:128 * (j + 1)]

        out_ref[...] = jnp.zeros((8, 128), jnp.float32)
        out_ref[0:1, :] = acc

    return kernel


def l_grad(image_A, image_B, image_fused):
    """Pallas implementation of L_Grad.forward. Inputs are NCHW with C == 1."""
    N, C, H, W = image_A.shape
    assert C == 1, "Sobelxy conv weight is [1,1,3,3] -> single-channel inputs"
    assert image_B.shape == image_A.shape and image_fused.shape == image_A.shape

    itemsize = jnp.dtype(image_A.dtype).itemsize
    WP = _round_up(W, 128)
    TH, HP, nS = _choose_tiles(H, WP, N, itemsize)
    th8 = TH // 8

    def prep(x):
        x3 = x.reshape(N, H, W)
        if HP != H or WP != W:
            # TODO(synk): one extra HBM pass, only taken when H/W actually need padding.
            x3 = jnp.pad(x3, ((0, 0), (0, HP - H), (0, WP - W)))
        return x3, x3.reshape(N, HP // 8, 8, WP)

    ac, a8 = prep(image_A)
    bc, b8 = prep(image_B)
    fc, f8 = prep(image_fused)

    # Center strip plus the previous / next 8-row group (only their edge row is used
    # as the 1-row halo), clamped at the image border and zeroed there in-kernel.
    c_spec = pl.BlockSpec((None, TH, WP), lambda n, s: (n, s, 0))
    p_spec = pl.BlockSpec((None, None, 8, WP),
                          lambda n, s: (n, jnp.maximum(s * th8 - 1, 0), 0, 0))
    n_spec = pl.BlockSpec((None, None, 8, WP),
                          lambda n, s: (n, jnp.minimum((s + 1) * th8, HP // 8 - 1), 0, 0))
    out_spec = pl.BlockSpec((None, None, 8, 128), lambda n, s: (n, s, 0, 0))

    kernel = _make_kernel(TH, WP, W, H, HP, nS)

    vmem_need = (6 * (TH + 16) * WP * itemsize     # double-buffered inputs
                 + 14 * TH * WP * 4                # live f32 slabs / spill headroom
                 + (2 << 20))
    vmem_limit = int(min(48 << 20, max(24 << 20, vmem_need + (12 << 20))))

    cost = pl.CostEstimate(
        flops=int(45 * N * HP * WP),
        transcendentals=0,
        bytes_accessed=int(3 * N * (HP + 16 * nS) * WP * itemsize + N * nS * 8 * 128 * 4),
    )

    partials = pl.pallas_call(
        kernel,
        out_shape=jax.ShapeDtypeStruct((N, nS, 8, 128), jnp.float32),
        grid_spec=pltpu.PrefetchScalarGridSpec(
            num_scalar_prefetch=0,
            grid=(N, nS),
            in_specs=[c_spec, p_spec, n_spec,
                      c_spec, p_spec, n_spec,
                      c_spec, p_spec, n_spec],
            out_specs=out_spec,
        ),
        compiler_params=pltpu.CompilerParams(
            dimension_semantics=("parallel", "parallel"),
            vmem_limit_bytes=vmem_limit,
        ),
        cost_estimate=cost,
    )(ac, a8, a8, bc, b8, b8, fc, f8, f8)

    # mean over the original N*C*H*W elements (F.l1_loss default reduction='mean').
    return jnp.sum(partials) / jnp.float32(N * C * H * W)


def _reference_l_grad(image_A, image_B, image_fused):
    """Pure-JAX reference (9-tap cross-correlation on a zero-padded image)."""
    kx = jnp.asarray(_KX, jnp.float32)
    ky = jnp.asarray(_KY, jnp.float32)

    def grad(x):
        x = x.astype(jnp.float32)[:, 0]                      # (N, H, W)
        xp = jnp.pad(x, ((0, 0), (1, 1), (1, 1)))
        H, W = x.shape[1], x.shape[2]
        gx = jnp.zeros_like(x)
        gy = jnp.zeros_like(x)
        for a in range(3):
            for b in range(3):
                win = xp[:, a:a + H, b:b + W]
                gx = gx + kx[a, b] * win
                gy = gy + ky[a, b] * win
        return jnp.abs(gx) + jnp.abs(gy)

    gj = jnp.maximum(grad(image_A), grad(image_B))
    return jnp.mean(jnp.abs(grad(image_fused) - gj))


if __name__ == "__main__":
    key = jax.random.PRNGKey(0)

    cases = [
        (2, 1, 16, 16),    # two strips per image, W padded to one lane group
        (2, 1, 48, 32),    # multiple strips: first / interior / last halo handling
        (1, 1, 20, 24),    # H not a multiple of 8 -> masked pad rows + padded cols
        (1, 1, 16, 256),   # W already lane-dense, exercises lane folding
        (1, 1, 136, 40),   # ceil8(H) has no mid-size divisor -> ragged-H pad path
    ]

    for shape in cases:
        key, kA, kB, kF = jax.random.split(key, 4)
        img_a = jax.random.uniform(kA, shape, dtype=jnp.float32)
        img_b = jax.random.uniform(kB, shape, dtype=jnp.float32)
        img_f = jax.random.uniform(kF, shape, dtype=jnp.float32)

        out = jax.block_until_ready(l_grad(img_a, img_b, img_f))
        ref = jax.block_until_ready(_reference_l_grad(img_a, img_b, img_f))
        assert jnp.allclose(out, ref, rtol=1e-5, atol=1e-5), (shape, float(out), float(ref))

    print("KERNEL_OK")
</pallas_src>

<mosaic_0001>
module attributes {stable_mosaic.version = 11 : i64} {
  func.func @kernel(%arg0: i32, %arg1: i32, %arg2: memref<1x8x128xf32, #tpu.memory_space<vmem>>, %arg3: memref<1x1x8x128xf32, #tpu.memory_space<vmem>>, %arg4: memref<1x1x8x128xf32, #tpu.memory_space<vmem>>, %arg5: memref<1x8x128xf32, #tpu.memory_space<vmem>>, %arg6: memref<1x1x8x128xf32, #tpu.memory_space<vmem>>, %arg7: memref<1x1x8x128xf32, #tpu.memory_space<vmem>>, %arg8: memref<1x8x128xf32, #tpu.memory_space<vmem>>, %arg9: memref<1x1x8x128xf32, #tpu.memory_space<vmem>>, %arg10: memref<1x1x8x128xf32, #tpu.memory_space<vmem>>, %arg11: memref<1x1x8x128xf32, #tpu.memory_space<vmem>>) attributes {dimension_semantics = [#tpu.dimension_semantics<parallel>, #tpu.dimension_semantics<parallel>], iteration_bounds = array<i64: 2, 2>, scalar_prefetch = 0 : i64, scratch_operands = 0 : i64, tpu.core_type = #tpu.core_type<tc>, window_params = [{transform_indices = @transform_0, window_bounds = array<i64: 1, 8, 128>}, {transform_indices = @transform_1, window_bounds = array<i64: 1, 1, 8, 128>}, {transform_indices = @transform_2, window_bounds = array<i64: 1, 1, 8, 128>}, {transform_indices = @transform_3, window_bounds = array<i64: 1, 8, 128>}, {transform_indices = @transform_4, window_bounds = array<i64: 1, 1, 8, 128>}, {transform_indices = @transform_5, window_bounds = array<i64: 1, 1, 8, 128>}, {transform_indices = @transform_6, window_bounds = array<i64: 1, 8, 128>}, {transform_indices = @transform_7, window_bounds = array<i64: 1, 1, 8, 128>}, {transform_indices = @transform_8, window_bounds = array<i64: 1, 1, 8, 128>}, {transform_indices = @transform_9, window_bounds = array<i64: 1, 1, 8, 128>}]} {
    %c0_i32 = arith.constant 0 : i32
    %0 = arith.cmpi sgt, %arg1, %c0_i32 : i32
    %1 = arith.extui %0 : i1 to i32
    %2 = arith.sitofp %1 : i32 to f32
    %c1_i32 = arith.constant 1 : i32
    %3 = arith.cmpi slt, %arg1, %c1_i32 : i32
    %4 = arith.extui %3 : i1 to i32
    %5 = arith.sitofp %4 : i32 to f32
    %cst = arith.constant 0.000000e+00 : f32
    %6 = vector.broadcast %cst : f32 to vector<8x1xf32>
    %cst_0 = arith.constant 0.000000e+00 : f32
    %7 = vector.broadcast %cst_0 : f32 to vector<1x1xf32>
    %c0 = arith.constant 0 : index
    %c0_1 = arith.constant 0 : index
    %c0_2 = arith.constant 0 : index
    %8 = vector.load %arg2[%c0, %c0_1, %c0_2] : memref<1x8x128xf32, #tpu.memory_space<vmem>>, vector<1x8x128xf32>
    %9 = vector.shape_cast %8 : vector<1x8x128xf32> to vector<8x128xf32>
    %c0_3 = arith.constant 0 : index
    %c0_4 = arith.constant 0 : index
    %c7 = arith.constant 7 : index
    %c0_5 = arith.constant 0 : index
    %10 = vector.load %arg3[%c0_3, %c0_4, %c7, %c0_5] : memref<1x1x8x128xf32, #tpu.memory_space<vmem>>, vector<1x1x1x128xf32>
    %11 = vector.shape_cast %10 : vector<1x1x1x128xf32> to vector<1x128xf32>
    %12 = vector.broadcast %2 : f32 to vector<1x128xf32>
    %13 = arith.mulf %11, %12 : vector<1x128xf32>
    %c0_6 = arith.constant 0 : index
    %c0_7 = arith.constant 0 : index
    %c0_8 = arith.constant 0 : index
    %c0_9 = arith.constant 0 : index
    %14 = vector.load %arg4[%c0_6, %c0_7, %c0_8, %c0_9] : memref<1x1x8x128xf32, #tpu.memory_space<vmem>>, vector<1x1x1x128xf32>
    %15 = vector.shape_cast %14 : vector<1x1x1x128xf32> to vector<1x128xf32>
    %16 = vector.broadcast %5 : f32 to vector<1x128xf32>
    %17 = arith.mulf %15, %16 : vector<1x128xf32>
    %18 = vector.extract_strided_slice %9 {offsets = [0, 0], sizes = [8, 127], strides = [1, 1]} : vector<8x128xf32> to vector<8x127xf32>
    %19 = tpu.concatenate %6, %18 in 1 : vector<8x1xf32>, vector<8x127xf32> -> vector<8x128xf32>
    %20 = vector.extract_strided_slice %9 {offsets = [0, 1], sizes = [8, 127], strides = [1, 1]} : vector<8x128xf32> to vector<8x127xf32>
    %21 = tpu.concatenate %20, %6 in 1 : vector<8x127xf32>, vector<8x1xf32> -> vector<8x128xf32>
    %22 = arith.subf %21, %19 : vector<8x128xf32>
    %cst_10 = arith.constant 2.000000e+00 : f32
    %23 = vector.broadcast %cst_10 : f32 to vector<8x128xf32>
    %24 = arith.mulf %23, %9 : vector<8x128xf32>
    %25 = arith.addf %19, %24 : vector<8x128xf32>
    %26 = arith.addf %25, %21 : vector<8x128xf32>
    %27 = vector.extract_strided_slice %13 {offsets = [0, 0], sizes = [1, 127], strides = [1, 1]} : vector<1x128xf32> to vector<1x127xf32>
    %28 = tpu.concatenate %7, %27 in 1 : vector<1x1xf32>, vector<1x127xf32> -> vector<1x128xf32>
    %29 = vector.extract_strided_slice %13 {offsets = [0, 1], sizes = [1, 127], strides = [1, 1]} : vector<1x128xf32> to vector<1x127xf32>
    %30 = tpu.concatenate %29, %7 in 1 : vector<1x127xf32>, vector<1x1xf32> -> vector<1x128xf32>
    %31 = arith.subf %30, %28 : vector<1x128xf32>
    %cst_11 = arith.constant 2.000000e+00 : f32
    %32 = vector.broadcast %cst_11 : f32 to vector<1x128xf32>
    %33 = arith.mulf %32, %13 : vector<1x128xf32>
    %34 = arith.addf %28, %33 : vector<1x128xf32>
    %35 = arith.addf %34, %30 : vector<1x128xf32>
    %36 = vector.extract_strided_slice %17 {offsets = [0, 0], sizes = [1, 127], strides = [1, 1]} : vector<1x128xf32> to vector<1x127xf32>
    %37 = tpu.concatenate %7, %36 in 1 : vector<1x1xf32>, vector<1x127xf32> -> vector<1x128xf32>
    %38 = vector.extract_strided_slice %17 {offsets = [0, 1], sizes = [1, 127], strides = [1, 1]} : vector<1x128xf32> to vector<1x127xf32>
    %39 = tpu.concatenate %38, %7 in 1 : vector<1x127xf32>, vector<1x1xf32> -> vector<1x128xf32>
    %40 = arith.subf %39, %37 : vector<1x128xf32>
    %cst_12 = arith.constant 2.000000e+00 : f32
    %41 = vector.broadcast %cst_12 : f32 to vector<1x128xf32>
    %42 = arith.mulf %41, %17 : vector<1x128xf32>
    %43 = arith.addf %37, %42 : vector<1x128xf32>
    %44 = arith.addf %43, %39 : vector<1x128xf32>
    %45 = vector.extract_strided_slice %22 {offsets = [0, 0], sizes = [6, 128], strides = [1, 1]} : vector<8x128xf32> to vector<6x128xf32>
    %46 = vector.extract_strided_slice %22 {offsets = [1, 0], sizes = [6, 128], strides = [1, 1]} : vector<8x128xf32> to vector<6x128xf32>
    %cst_13 = arith.constant 2.000000e+00 : f32
    %47 = vector.broadcast %cst_13 : f32 to vector<6x128xf32>
    %48 = arith.mulf %47, %46 : vector<6x128xf32>
    %49 = arith.addf %45, %48 : vector<6x128xf32>
    %50 = vector.extract_strided_slice %22 {offsets = [2, 0], sizes = [6, 128], strides = [1, 1]} : vector<8x128xf32> to vector<6x128xf32>
    %51 = arith.addf %49, %50 : vector<6x128xf32>
    %52 = math.absf %51 : vector<6x128xf32>
    %53 = vector.extract_strided_slice %26 {offsets = [0, 0], sizes = [6, 128], strides = [1, 1]} : vector<8x128xf32> to vector<6x128xf32>
    %54 = vector.extract_strided_slice %26 {offsets = [2, 0], sizes = [6, 128], strides = [1, 1]} : vector<8x128xf32> to vector<6x128xf32>
    %55 = arith.subf %53, %54 : vector<6x128xf32>
    %56 = math.absf %55 : vector<6x128xf32>
    %57 = arith.addf %52, %56 : vector<6x128xf32>
    %58 = vector.extract_strided_slice %22 {offsets = [0, 0], sizes = [1, 128], strides = [1, 1]} : vector<8x128xf32> to vector<1x128xf32>
    %cst_14 = arith.constant 2.000000e+00 : f32
    %59 = vector.broadcast %cst_14 : f32 to vector<1x128xf32>
    %60 = arith.mulf %59, %58 : vector<1x128xf32>
    %61 = arith.addf %31, %60 : vector<1x128xf32>
    %62 = vector.extract_strided_slice %22 {offsets = [1, 0], sizes = [1, 128], strides = [1, 1]} : vector<8x128xf32> to vector<1x128xf32>
    %63 = arith.addf %61, %62 : vector<1x128xf32>
    %64 = math.absf %63 : vector<1x128xf32>
    %65 = vector.extract_strided_slice %26 {offsets = [1, 0], sizes = [1, 128], strides = [1, 1]} : vector<8x128xf32> to vector<1x128xf32>
    %66 = arith.subf %35, %65 : vector<1x128xf32>
    %67 = math.absf %66 : vector<1x128xf32>
    %68 = arith.addf %64, %67 : vector<1x128xf32>
    %69 = vector.extract_strided_slice %22 {offsets = [6, 0], sizes = [1, 128], strides = [1, 1]} : vector<8x128xf32> to vector<1x128xf32>
    %70 = vector.extract_strided_slice %22 {offsets = [7, 0], sizes = [1, 128], strides = [1, 1]} : vector<8x128xf32> to vector<1x128xf32>
    %cst_15 = arith.constant 2.000000e+00 : f32
    %71 = vector.broadcast %cst_15 : f32 to vector<1x128xf32>
    %72 = arith.mulf %71, %70 : vector<1x128xf32>
    %73 = arith.addf %69, %72 : vector<1x128xf32>
    %74 = arith.addf %73, %40 : vector<1x128xf32>
    %75 = math.absf %74 : vector<1x128xf32>
    %76 = vector.extract_strided_slice %26 {offsets = [6, 0], sizes = [1, 128], strides = [1, 1]} : vector<8x128xf32> to vector<1x128xf32>
    %77 = arith.subf %76, %44 : vector<1x128xf32>
    %78 = math.absf %77 : vector<1x128xf32>
    %79 = arith.addf %75, %78 : vector<1x128xf32>
    %c0_16 = arith.constant 0 : index
    %c0_17 = arith.constant 0 : index
    %c0_18 = arith.constant 0 : index
    %80 = vector.load %arg5[%c0_16, %c0_17, %c0_18] : memref<1x8x128xf32, #tpu.memory_space<vmem>>, vector<1x8x128xf32>
    %81 = vector.shape_cast %80 : vector<1x8x128xf32> to vector<8x128xf32>
    %c0_19 = arith.constant 0 : index
    %c0_20 = arith.constant 0 : index
    %c7_21 = arith.constant 7 : index
    %c0_22 = arith.constant 0 : index
    %82 = vector.load %arg6[%c0_19, %c0_20, %c7_21, %c0_22] : memref<1x1x8x128xf32, #tpu.memory_space<vmem>>, vector<1x1x1x128xf32>
    %83 = vector.shape_cast %82 : vector<1x1x1x128xf32> to vector<1x128xf32>
    %84 = vector.broadcast %2 : f32 to vector<1x128xf32>
    %85 = arith.mulf %83, %84 : vector<1x128xf32>
    %c0_23 = arith.constant 0 : index
    %c0_24 = arith.constant 0 : index
    %c0_25 = arith.constant 0 : index
    %c0_26 = arith.constant 0 : index
    %86 = vector.load %arg7[%c0_23, %c0_24, %c0_25, %c0_26] : memref<1x1x8x128xf32, #tpu.memory_space<vmem>>, vector<1x1x1x128xf32>
    %87 = vector.shape_cast %86 : vector<1x1x1x128xf32> to vector<1x128xf32>
    %88 = vector.broadcast %5 : f32 to vector<1x128xf32>
    %89 = arith.mulf %87, %88 : vector<1x128xf32>
    %90 = vector.extract_strided_slice %81 {offsets = [0, 0], sizes = [8, 127], strides = [1, 1]} : vector<8x128xf32> to vector<8x127xf32>
    %91 = tpu.concatenate %6, %90 in 1 : vector<8x1xf32>, vector<8x127xf32> -> vector<8x128xf32>
    %92 = vector.extract_strided_slice %81 {offsets = [0, 1], sizes = [8, 127], strides = [1, 1]} : vector<8x128xf32> to vector<8x127xf32>
    %93 = tpu.concatenate %92, %6 in 1 : vector<8x127xf32>, vector<8x1xf32> -> vector<8x128xf32>
    %94 = arith.subf %93, %91 : vector<8x128xf32>
    %cst_27 = arith.constant 2.000000e+00 : f32
    %95 = vector.broadcast %cst_27 : f32 to vector<8x128xf32>
    %96 = arith.mulf %95, %81 : vector<8x128xf32>
    %97 = arith.addf %91, %96 : vector<8x128xf32>
    %98 = arith.addf %97, %93 : vector<8x128xf32>
    %99 = vector.extract_strided_slice %85 {offsets = [0, 0], sizes = [1, 127], strides = [1, 1]} : vector<1x128xf32> to vector<1x127xf32>
    %100 = tpu.concatenate %7, %99 in 1 : vector<1x1xf32>, vector<1x127xf32> -> vector<1x128xf32>
    %101 = vector.extract_strided_slice %85 {offsets = [0, 1], sizes = [1, 127], strides = [1, 1]} : vector<1x128xf32> to vector<1x127xf32>
    %102 = tpu.concatenate %101, %7 in 1 : vector<1x127xf32>, vector<1x1xf32> -> vector<1x128xf32>
    %103 = arith.subf %102, %100 : vector<1x128xf32>
    %cst_28 = arith.constant 2.000000e+00 : f32
    %104 = vector.broadcast %cst_28 : f32 to vector<1x128xf32>
    %105 = arith.mulf %104, %85 : vector<1x128xf32>
    %106 = arith.addf %100, %105 : vector<1x128xf32>
    %107 = arith.addf %106, %102 : vector<1x128xf32>
    %108 = vector.extract_strided_slice %89 {offsets = [0, 0], sizes = [1, 127], strides = [1, 1]} : vector<1x128xf32> to vector<1x127xf32>
    %109 = tpu.concatenate %7, %108 in 1 : vector<1x1xf32>, vector<1x127xf32> -> vector<1x128xf32>
    %110 = vector.extract_strided_slice %89 {offsets = [0, 1], sizes = [1, 127], strides = [1, 1]} : vector<1x128xf32> to vector<1x127xf32>
    %111 = tpu.concatenate %110, %7 in 1 : vector<1x127xf32>, vector<1x1xf32> -> vector<1x128xf32>
    %112 = arith.subf %111, %109 : vector<1x128xf32>
    %cst_29 = arith.constant 2.000000e+00 : f32
    %113 = vector.broadcast %cst_29 : f32 to vector<1x128xf32>
    %114 = arith.mulf %113, %89 : vector<1x128xf32>
    %115 = arith.addf %109, %114 : vector<1x128xf32>
    %116 = arith.addf %115, %111 : vector<1x128xf32>
    %117 = vector.extract_strided_slice %94 {offsets = [0, 0], sizes = [6, 128], strides = [1, 1]} : vector<8x128xf32> to vector<6x128xf32>
    %118 = vector.extract_strided_slice %94 {offsets = [1, 0], sizes = [6, 128], strides = [1, 1]} : vector<8x128xf32> to vector<6x128xf32>
    %cst_30 = arith.constant 2.000000e+00 : f32
    %119 = vector.broadcast %cst_30 : f32 to vector<6x128xf32>
    %120 = arith.mulf %119, %118 : vector<6x128xf32>
    %121 = arith.addf %117, %120 : vector<6x128xf32>
    %122 = vector.extract_strided_slice %94 {offsets = [2, 0], sizes = [6, 128], strides = [1, 1]} : vector<8x128xf32> to vector<6x128xf32>
    %123 = arith.addf %121, %122 : vector<6x128xf32>
    %124 = math.absf %123 : vector<6x128xf32>
    %125 = vector.extract_strided_slice %98 {offsets = [0, 0], sizes = [6, 128], strides = [1, 1]} : vector<8x128xf32> to vector<6x128xf32>
    %126 = vector.extract_strided_slice %98 {offsets = [2, 0], sizes = [6, 128], strides = [1, 1]} : vector<8x128xf32> to vector<6x128xf32>
    %127 = arith.subf %125, %126 : vector<6x128xf32>
    %128 = math.absf %127 : vector<6x128xf32>
    %129 = arith.addf %124, %128 : vector<6x128xf32>
    %130 = vector.extract_strided_slice %94 {offsets = [0, 0], sizes = [1, 128], strides = [1, 1]} : vector<8x128xf32> to vector<1x128xf32>
    %cst_31 = arith.constant 2.000000e+00 : f32
    %131 = vector.broadcast %cst_31 : f32 to vector<1x128xf32>
    %132 = arith.mulf %131, %130 : vector<1x128xf32>
    %133 = arith.addf %103, %132 : vector<1x128xf32>
    %134 = vector.extract_strided_slice %94 {offsets = [1, 0], sizes = [1, 128], strides = [1, 1]} : vector<8x128xf32> to vector<1x128xf32>
    %135 = arith.addf %133, %134 : vector<1x128xf32>
    %136 = math.absf %135 : vector<1x128xf32>
    %137 = vector.extract_strided_slice %98 {offsets = [1, 0], sizes = [1, 128], strides = [1, 1]} : vector<8x128xf32> to vector<1x128xf32>
    %138 = arith.subf %107, %137 : vector<1x128xf32>
    %139 = math.absf %138 : vector<1x128xf32>
    %140 = arith.addf %136, %139 : vector<1x128xf32>
    %141 = vector.extract_strided_slice %94 {offsets = [6, 0], sizes = [1, 128], strides = [1, 1]} : vector<8x128xf32> to vector<1x128xf32>
    %142 = vector.extract_strided_slice %94 {offsets = [7, 0], sizes = [1, 128], strides = [1, 1]} : vector<8x128xf32> to vector<1x128xf32>
    %cst_32 = arith.constant 2.000000e+00 : f32
    %143 = vector.broadcast %cst_32 : f32 to vector<1x128xf32>
    %144 = arith.mulf %143, %142 : vector<1x128xf32>
    %145 = arith.addf %141, %144 : vector<1x128xf32>
    %146 = arith.addf %145, %112 : vector<1x128xf32>
    %147 = math.absf %146 : vector<1x128xf32>
    %148 = vector.extract_strided_slice %98 {offsets = [6, 0], sizes = [1, 128], strides = [1, 1]} : vector<8x128xf32> to vector<1x128xf32>
    %149 = arith.subf %148, %116 : vector<1x128xf32>
    %150 = math.absf %149 : vector<1x128xf32>
    %151 = arith.addf %147, %150 : vector<1x128xf32>
    %c0_33 = arith.constant 0 : index
    %c0_34 = arith.constant 0 : index
    %c0_35 = arith.constant 0 : index
    %152 = vector.load %arg8[%c0_33, %c0_34, %c0_35] : memref<1x8x128xf32, #tpu.memory_space<vmem>>, vector<1x8x128xf32>
    %153 = vector.shape_cast %152 : vector<1x8x128xf32> to vector<8x128xf32>
    %c0_36 = arith.constant 0 : index
    %c0_37 = arith.constant 0 : index
    %c7_38 = arith.constant 7 : index
    %c0_39 = arith.constant 0 : index
    %154 = vector.load %arg9[%c0_36, %c0_37, %c7_38, %c0_39] : memref<1x1x8x128xf32, #tpu.memory_space<vmem>>, vector<1x1x1x128xf32>
    %155 = vector.shape_cast %154 : vector<1x1x1x128xf32> to vector<1x128xf32>
    %156 = vector.broadcast %2 : f32 to vector<1x128xf32>
    %157 = arith.mulf %155, %156 : vector<1x128xf32>
    %c0_40 = arith.constant 0 : index
    %c0_41 = arith.constant 0 : index
    %c0_42 = arith.constant 0 : index
    %c0_43 = arith.constant 0 : index
    %158 = vector.load %arg10[%c0_40, %c0_41, %c0_42, %c0_43] : memref<1x1x8x128xf32, #tpu.memory_space<vmem>>, vector<1x1x1x128xf32>
    %159 = vector.shape_cast %158 : vector<1x1x1x128xf32> to vector<1x128xf32>
    %160 = vector.broadcast %5 : f32 to vector<1x128xf32>
    %161 = arith.mulf %159, %160 : vector<1x128xf32>
    %162 = vector.extract_strided_slice %153 {offsets = [0, 0], sizes = [8, 127], strides = [1, 1]} : vector<8x128xf32> to vector<8x127xf32>
    %163 = tpu.concatenate %6, %162 in 1 : vector<8x1xf32>, vector<8x127xf32> -> vector<8x128xf32>
    %164 = vector.extract_strided_slice %153 {offsets = [0, 1], sizes = [8, 127], strides = [1, 1]} : vector<8x128xf32> to vector<8x127xf32>
    %165 = tpu.concatenate %164, %6 in 1 : vector<8x127xf32>, vector<8x1xf32> -> vector<8x128xf32>
    %166 = arith.subf %165, %163 : vector<8x128xf32>
    %cst_44 = arith.constant 2.000000e+00 : f32
    %167 = vector.broadcast %cst_44 : f32 to vector<8x128xf32>
    %168 = arith.mulf %167, %153 : vector<8x128xf32>
    %169 = arith.addf %163, %168 : vector<8x128xf32>
    %170 = arith.addf %169, %165 : vector<8x128xf32>
    %171 = vector.extract_strided_slice %157 {offsets = [0, 0], sizes = [1, 127], strides = [1, 1]} : vector<1x128xf32> to vector<1x127xf32>
    %172 = tpu.concatenate %7, %171 in 1 : vector<1x1xf32>, vector<1x127xf32> -> vector<1x128xf32>
    %173 = vector.extract_strided_slice %157 {offsets = [0, 1], sizes = [1, 127], strides = [1, 1]} : vector<1x128xf32> to vector<1x127xf32>
    %174 = tpu.concatenate %173, %7 in 1 : vector<1x127xf32>, vector<1x1xf32> -> vector<1x128xf32>
    %175 = arith.subf %174, %172 : vector<1x128xf32>
    %cst_45 = arith.constant 2.000000e+00 : f32
    %176 = vector.broadcast %cst_45 : f32 to vector<1x128xf32>
    %177 = arith.mulf %176, %157 : vector<1x128xf32>
    %178 = arith.addf %172, %177 : vector<1x128xf32>
    %179 = arith.addf %178, %174 : vector<1x128xf32>
    %180 = vector.extract_strided_slice %161 {offsets = [0, 0], sizes = [1, 127], strides = [1, 1]} : vector<1x128xf32> to vector<1x127xf32>
    %181 = tpu.concatenate %7, %180 in 1 : vector<1x1xf32>, vector<1x127xf32> -> vector<1x128xf32>
    %182 = vector.extract_strided_slice %161 {offsets = [0, 1], sizes = [1, 127], strides = [1, 1]} : vector<1x128xf32> to vector<1x127xf32>
    %183 = tpu.concatenate %182, %7 in 1 : vector<1x127xf32>, vector<1x1xf32> -> vector<1x128xf32>
    %184 = arith.subf %183, %181 : vector<1x128xf32>
    %cst_46 = arith.constant 2.000000e+00 : f32
    %185 = vector.broadcast %cst_46 : f32 to vector<1x128xf32>
    %186 = arith.mulf %185, %161 : vector<1x128xf32>
    %187 = arith.addf %181, %186 : vector<1x128xf32>
    %188 = arith.addf %187, %183 : vector<1x128xf32>
    %189 = vector.extract_strided_slice %166 {offsets = [0, 0], sizes = [6, 128], strides = [1, 1]} : vector<8x128xf32> to vector<6x128xf32>
    %190 = vector.extract_strided_slice %166 {offsets = [1, 0], sizes = [6, 128], strides = [1, 1]} : vector<8x128xf32> to vector<6x128xf32>
    %cst_47 = arith.constant 2.000000e+00 : f32
    %191 = vector.broadcast %cst_47 : f32 to vector<6x128xf32>
    %192 = arith.mulf %191, %190 : vector<6x128xf32>
    %193 = arith.addf %189, %192 : vector<6x128xf32>
    %194 = vector.extract_strided_slice %166 {offsets = [2, 0], sizes = [6, 128], strides = [1, 1]} : vector<8x128xf32> to vector<6x128xf32>
    %195 = arith.addf %193, %194 : vector<6x128xf32>
    %196 = math.absf %195 : vector<6x128xf32>
    %197 = vector.extract_strided_slice %170 {offsets = [0, 0], sizes = [6, 128], strides = [1, 1]} : vector<8x128xf32> to vector<6x128xf32>
    %198 = vector.extract_strided_slice %170 {offsets = [2, 0], sizes = [6, 128], strides = [1, 1]} : vector<8x128xf32> to vector<6x128xf32>
    %199 = arith.subf %197, %198 : vector<6x128xf32>
    %200 = math.absf %199 : vector<6x128xf32>
    %201 = arith.addf %196, %200 : vector<6x128xf32>
    %202 = vector.extract_strided_slice %166 {offsets = [0, 0], sizes = [1, 128], strides = [1, 1]} : vector<8x128xf32> to vector<1x128xf32>
    %cst_48 = arith.constant 2.000000e+00 : f32
    %203 = vector.broadcast %cst_48 : f32 to vector<1x128xf32>
    %204 = arith.mulf %203, %202 : vector<1x128xf32>
    %205 = arith.addf %175, %204 : vector<1x128xf32>
    %206 = vector.extract_strided_slice %166 {offsets = [1, 0], sizes = [1, 128], strides = [1, 1]} : vector<8x128xf32> to vector<1x128xf32>
    %207 = arith.addf %205, %206 : vector<1x128xf32>
    %208 = math.absf %207 : vector<1x128xf32>
    %209 = vector.extract_strided_slice %170 {offsets = [1, 0], sizes = [1, 128], strides = [1, 1]} : vector<8x128xf32> to vector<1x128xf32>
    %210 = arith.subf %179, %209 : vector<1x128xf32>
    %211 = math.absf %210 : vector<1x128xf32>
    %212 = arith.addf %208, %211 : vector<1x128xf32>
    %213 = vector.extract_strided_slice %166 {offsets = [6, 0], sizes = [1, 128], strides = [1, 1]} : vector<8x128xf32> to vector<1x128xf32>
    %214 = vector.extract_strided_slice %166 {offsets = [7, 0], sizes = [1, 128], strides = [1, 1]} : vector<8x128xf32> to vector<1x128xf32>
    %cst_49 = arith.constant 2.000000e+00 : f32
    %215 = vector.broadcast %cst_49 : f32 to vector<1x128xf32>
    %216 = arith.mulf %215, %214 : vector<1x128xf32>
    %217 = arith.addf %213, %216 : vector<1x128xf32>
    %218 = arith.addf %217, %184 : vector<1x128xf32>
    %219 = math.absf %218 : vector<1x128xf32>
    %220 = vector.extract_strided_slice %170 {offsets = [6, 0], sizes = [1, 128], strides = [1, 1]} : vector<8x128xf32> to vector<1x128xf32>
    %221 = arith.subf %220, %188 : vector<1x128xf32>
    %222 = math.absf %221 : vector<1x128xf32>
    %223 = arith.addf %219, %222 : vector<1x128xf32>
    %224 = arith.maximumf %57, %129 : vector<6x128xf32>
    %225 = arith.subf %201, %224 : vector<6x128xf32>
    %226 = math.absf %225 : vector<6x128xf32>
    %227 = arith.maximumf %68, %140 : vector<1x128xf32>
    %228 = arith.subf %212, %227 : vector<1x128xf32>
    %229 = math.absf %228 : vector<1x128xf32>
    %230 = arith.maximumf %79, %151 : vector<1x128xf32>
    %231 = arith.subf %223, %230 : vector<1x128xf32>
    %232 = math.absf %231 : vector<1x128xf32>
    %cst_50 = arith.constant dense<0.000000e+00> : vector<128xf32>
    %233 = vector.multi_reduction <add>, %226, %cst_50 [0] : vector<6x128xf32> to vector<128xf32>
    %234 = vector.shape_cast %233 : vector<128xf32> to vector<1x128xf32>
    %235 = arith.addf %234, %229 : vector<1x128xf32>
    %236 = arith.addf %235, %232 : vector<1x128xf32>
    %237 = tpu.iota {dimensions = array<i32: 1>} : vector<1x128xi32>
    %c16_i32 = arith.constant 16 : i32
    %238 = vector.broadcast %c16_i32 : i32 to vector<1x128xi32>
    %239 = arith.cmpi slt, %237, %238 : vector<1x128xi32>
    %240 = arith.extui %239 : vector<1x128xi1> to vector<1x128xi32>
    %241 = arith.sitofp %240 : vector<1x128xi32> to vector<1x128xf32>
    %242 = arith.mulf %236, %241 : vector<1x128xf32>
    %cst_51 = arith.constant 0.000000e+00 : f32
    %243 = vector.broadcast %cst_51 : f32 to vector<8x128xf32>
    %c0_52 = arith.constant 0 : index
    %c0_53 = arith.constant 0 : index
    %c0_54 = arith.constant 0 : index
    %c0_55 = arith.constant 0 : index
    %244 = vector.load %arg11[%c0_52, %c0_53, %c0_54, %c0_55] : memref<1x1x8x128xf32, #tpu.memory_space<vmem>>, vector<1x1x8x128xf32>
    %245 = vector.shape_cast %244 : vector<1x1x8x128xf32> to vector<8x128xf32>
    %246 = vector.shape_cast %243 : vector<8x128xf32> to vector<1x1x8x128xf32>
    tpu.vector_store %arg11[%c0_52, %c0_53, %c0_54, %c0_55], %246 {strides = array<i32>} : memref<1x1x8x128xf32, #tpu.memory_space<vmem>>, vector<1x1x8x128xf32>,
    %c0_56 = arith.constant 0 : index
    %c0_57 = arith.constant 0 : index
    %c0_58 = arith.constant 0 : index
    %c0_59 = arith.constant 0 : index
    %247 = vector.load %arg11[%c0_56, %c0_57, %c0_58, %c0_59] : memref<1x1x8x128xf32, #tpu.memory_space<vmem>>, vector<1x1x1x128xf32>
    %248 = vector.shape_cast %247 : vector<1x1x1x128xf32> to vector<1x128xf32>
    %249 = vector.shape_cast %242 : vector<1x128xf32> to vector<1x1x1x128xf32>
    tpu.vector_store %arg11[%c0_56, %c0_57, %c0_58, %c0_59], %249 {strides = array<i32>} : memref<1x1x8x128xf32, #tpu.memory_space<vmem>>, vector<1x1x1x128xf32>,
    return
  }
  func.func @transform_0(%arg0: i32, %arg1: i32) -> (i32, i32, i32) {
    %c0_i32 = arith.constant 0 : i32
    %c0_i32_0 = arith.constant 0 : i32
    return %arg0, %arg1, %c0_i32 : i32, i32, i32
  }
  func.func @transform_1(%arg0: i32, %arg1: i32) -> (i32, i32, i32, i32) {
    %c1_i32 = arith.constant 1 : i32
    %0 = arith.muli %arg1, %c1_i32 : i32
    %c1_i32_0 = arith.constant 1 : i32
    %1 = arith.subi %0, %c1_i32_0 : i32
    %c0_i32 = arith.constant 0 : i32
    %2 = arith.maxsi %1, %c0_i32 : i32
    %c0_i32_1 = arith.constant 0 : i32
    %c0_i32_2 = arith.constant 0 : i32
    %c0_i32_3 = arith.constant 0 : i32
    return %arg0, %2, %c0_i32_1, %c0_i32_2 : i32, i32, i32, i32
  }
  func.func @transform_2(%arg0: i32, %arg1: i32) -> (i32, i32, i32, i32) {
    %c1_i32 = arith.constant 1 : i32
    %0 = arith.addi %arg1, %c1_i32 : i32
    %c1_i32_0 = arith.constant 1 : i32
    %1 = arith.muli %0, %c1_i32_0 : i32
    %c1_i32_1 = arith.constant 1 : i32
    %2 = arith.minsi %1, %c1_i32_1 : i32
    %c0_i32 = arith.constant 0 : i32
    %c0_i32_2 = arith.constant 0 : i32
    %c0_i32_3 = arith.constant 0 : i32
    return %arg0, %2, %c0_i32, %c0_i32_2 : i32, i32, i32, i32
  }
  func.func @transform_3(%arg0: i32, %arg1: i32) -> (i32, i32, i32) {
    %c0_i32 = arith.constant 0 : i32
    %c0_i32_0 = arith.constant 0 : i32
    return %arg0, %arg1, %c0_i32 : i32, i32, i32
  }
  func.func @transform_4(%arg0: i32, %arg1: i32) -> (i32, i32, i32, i32) {
    %c1_i32 = arith.constant 1 : i32
    %0 = arith.muli %arg1, %c1_i32 : i32
    %c1_i32_0 = arith.constant 1 : i32
    %1 = arith.subi %0, %c1_i32_0 : i32
    %c0_i32 = arith.constant 0 : i32
    %2 = arith.maxsi %1, %c0_i32 : i32
    %c0_i32_1 = arith.constant 0 : i32
    %c0_i32_2 = arith.constant 0 : i32
    %c0_i32_3 = arith.constant 0 : i32
    return %arg0, %2, %c0_i32_1, %c0_i32_2 : i32, i32, i32, i32
  }
  func.func @transform_5(%arg0: i32, %arg1: i32) -> (i32, i32, i32, i32) {
    %c1_i32 = arith.constant 1 : i32
    %0 = arith.addi %arg1, %c1_i32 : i32
    %c1_i32_0 = arith.constant 1 : i32
    %1 = arith.muli %0, %c1_i32_0 : i32
    %c1_i32_1 = arith.constant 1 : i32
    %2 = arith.minsi %1, %c1_i32_1 : i32
    %c0_i32 = arith.constant 0 : i32
    %c0_i32_2 = arith.constant 0 : i32
    %c0_i32_3 = arith.constant 0 : i32
    return %arg0, %2, %c0_i32, %c0_i32_2 : i32, i32, i32, i32
  }
  func.func @transform_6(%arg0: i32, %arg1: i32) -> (i32, i32, i32) {
    %c0_i32 = arith.constant 0 : i32
    %c0_i32_0 = arith.constant 0 : i32
    return %arg0, %arg1, %c0_i32 : i32, i32, i32
  }
  func.func @transform_7(%arg0: i32, %arg1: i32) -> (i32, i32, i32, i32) {
    %c1_i32 = arith.constant 1 : i32
    %0 = arith.muli %arg1, %c1_i32 : i32
    %c1_i32_0 = arith.constant 1 : i32
    %1 = arith.subi %0, %c1_i32_0 : i32
    %c0_i32 = arith.constant 0 : i32
    %2 = arith.maxsi %1, %c0_i32 : i32
    %c0_i32_1 = arith.constant 0 : i32
    %c0_i32_2 = arith.constant 0 : i32
    %c0_i32_3 = arith.constant 0 : i32
    return %arg0, %2, %c0_i32_1, %c0_i32_2 : i32, i32, i32, i32
  }
  func.func @transform_8(%arg0: i32, %arg1: i32) -> (i32, i32, i32, i32) {
    %c1_i32 = arith.constant 1 : i32
    %0 = arith.addi %arg1, %c1_i32 : i32
    %c1_i32_0 = arith.constant 1 : i32
    %1 = arith.muli %0, %c1_i32_0 : i32
    %c1_i32_1 = arith.constant 1 : i32
    %2 = arith.minsi %1, %c1_i32_1 : i32
    %c0_i32 = arith.constant 0 : i32
    %c0_i32_2 = arith.constant 0 : i32
    %c0_i32_3 = arith.constant 0 : i32
    return %arg0, %2, %c0_i32, %c0_i32_2 : i32, i32, i32, i32
  }
  func.func @transform_9(%arg0: i32, %arg1: i32) -> (i32, i32, i32, i32) {
    %c0_i32 = arith.constant 0 : i32
    %c0_i32_0 = arith.constant 0 : i32
    %c0_i32_1 = arith.constant 0 : i32
    return %arg0, %arg1, %c0_i32, %c0_i32_0 : i32, i32, i32, i32
  }
}

</mosaic_0001>

<llo_original>
// kernel: tpu_custom_call.1
$region0: #{tpu_custom_call.1}
  #allocation0 [shape = 'u32[]', space=smem, size = 0x4, offset = 0x4, fixed_abs, tag = 'smem constant byte address 0x4 - core index']
  #allocation1 [shape = 'u32[72,128]{1,0:T(1,128)}', space=vmem, size = 0x9000, scoped, tag = 'internal scratch']
  %s0 = inlined_call_operand.hbm [shape: f32[2,16,128], index: 0, kind: input, shape index: {}]
  %s1 = inlined_call_operand.hbm [shape: f32[2,2,8,128], index: 1, kind: input, shape index: {}]
  %s2 = inlined_call_operand.hbm [shape: f32[2,2,8,128], index: 2, kind: input, shape index: {}]
  %s3 = inlined_call_operand.hbm [shape: f32[2,16,128], index: 3, kind: input, shape index: {}]
  %s4 = inlined_call_operand.hbm [shape: f32[2,2,8,128], index: 4, kind: input, shape index: {}]
  %s5 = inlined_call_operand.hbm [shape: f32[2,2,8,128], index: 5, kind: input, shape index: {}]
  %s6 = inlined_call_operand.hbm [shape: f32[2,16,128], index: 6, kind: input, shape index: {}]
  %s7 = inlined_call_operand.hbm [shape: f32[2,2,8,128], index: 7, kind: input, shape index: {}]
  %s8 = inlined_call_operand.hbm [shape: f32[2,2,8,128], index: 8, kind: input, shape index: {}]
  %s9 = inlined_call_operand.hbm [shape: f32[2,2,8,128], index: 9, kind: output, shape index: {}]
  %s10 = sld [smem:[#allocation0]]
  $region105: #{tpu_custom_call.1} parent=0
    _
  %s12 = ssub.s32 1, %s10
  %s13 = scalar_select 0, %s12, %s10
  $region1: #{tpu_custom_call.1} parent=0
    #allocation2 [shape = 'u8[8192]{0}', space=vmem, size = 0x2000, scoped, tag = 'input window, operand 0']
    #allocation3 [shape = 's32[2]{0}', space=sflag, size = 0x8, scoped, tag = 'scoped memory for tpu_custom_call.1']
    #allocation4 [shape = 's32[2]{0}', space=sflag, size = 0x8, scoped, tag = 'scoped memory for tpu_custom_call.1']
    #allocation5 [shape = 'u8[8192]{0}', space=vmem, size = 0x2000, scoped, tag = 'input window, operand 1']
    #allocation6 [shape = 's32[2]{0}', space=sflag, size = 0x8, scoped, tag = 'scoped memory for tpu_custom_call.1']
    #allocation7 [shape = 'u8[8192]{0}', space=vmem, size = 0x2000, scoped, tag = 'input window, operand 2']
    #allocation8 [shape = 'u8[8192]{0}', space=vmem, size = 0x2000, scoped, tag = 'input window, operand 3']
    #allocation9 [shape = 's32[2]{0}', space=sflag, size = 0x8, scoped, tag = 'scoped memory for tpu_custom_call.1']
    #allocation10 [shape = 'u8[8192]{0}', space=vmem, size = 0x2000, scoped, tag = 'input window, operand 4']
    #allocation11 [shape = 'u8[8192]{0}', space=vmem, size = 0x2000, scoped, tag = 'input window, operand 5']
    #allocation12 [shape = 's32[2]{0}', space=sflag, size = 0x8, scoped, tag = 'scoped memory for tpu_custom_call.1']
    #allocation13 [shape = 'u8[8192]{0}', space=vmem, size = 0x2000, scoped, tag = 'input window, operand 6']
    #allocation14 [shape = 'u8[8192]{0}', space=vmem, size = 0x2000, scoped, tag = 'input window, operand 7']
    #allocation15 [shape = 's32[2]{0}', space=sflag, size = 0x8, scoped, tag = 'scoped memory for tpu_custom_call.1']
    #allocation16 [shape = 'u8[8192]{0}', space=vmem, size = 0x2000, scoped, tag = 'input window, operand 8']
    #allocation17 [shape = 'u8[8192]{0}', space=vmem, size = 0x2000, scoped, tag = 'output window, operand 0']
    %14 = vsyncpa [#allocation3], 0
    %s15 = scalar_lea.sflag [#allocation3], 1
    %16 = vsyncpa %s15, 0
    %17 = vsyncpa [#allocation6], 0
    %s18 = scalar_lea.sflag [#allocation6], 1
    %19 = vsyncpa %s18, 0
    %20 = vsyncpa [#allocation9], 0
    %s21 = scalar_lea.sflag [#allocation9], 1
    %22 = vsyncpa %s21, 0
    %23 = vsyncpa [#allocation12], 0
    %s24 = scalar_lea.sflag [#allocation12], 1
    %25 = vsyncpa %s24, 0
    %26 = vsyncpa [#allocation15], 0
    %s27 = scalar_lea.sflag [#allocation15], 1
    %28 = vsyncpa %s27, 0
    %29 = vsyncpa [#allocation4], 0
    %s30 = scalar_lea.sflag [#allocation4], 1
    %31 = vsyncpa %s30, 0
    loop: start=0, step=1, limit=6
    $region2: #{tpu_custom_call.1} parent=1 // loop_pre_header
      _
    $region3: #{tpu_custom_call.1} parent=1 // loop_header
      %s33 = sphi 0, %s37
      %p34 = scmp.ge.s32.totalorder %s33, 6
      %s40 = sphi 0, %s52
      %s41 = sphi 0, %s48
      %s42 = sphi 0, %s40
      %s43 = sphi 0, %s41
      %s44 = sphi 0, %s42
      %s45 = sphi 0, %s43
      %s57 = sphi 0, %s59
      %s60 = sphi 0, %s57
      %s61 = sphi 0, %s60
      %s77 = sphi 0, %s61
      %s91 = sphi 0, %s93
      %s94 = sphi 0, %s91
      %s95 = sphi 0, %s94
      %s111 = sphi 0, %s95
      %s125 = sphi 0, %s127
      %s128 = sphi 0, %s125
      %s129 = sphi 0, %s128
      %s145 = sphi 0, %s129
      %s153 = sphi 0, %s155
      %s156 = sphi 0, %s153
      %s157 = sphi 0, %s156
      %s173 = sphi 0, %s157
      %s187 = sphi 0, %s189
      %s190 = sphi 0, %s187
      %s191 = sphi 0, %s190
      %s207 = sphi 0, %s191
      %s221 = sphi 0, %s223
      %s224 = sphi 0, %s221
      %s225 = sphi 0, %s224
      %s241 = sphi 0, %s225
      %s249 = sphi 0, %s251
      %s252 = sphi 0, %s249
      %s253 = sphi 0, %s252
      %s269 = sphi 0, %s253
      %s283 = sphi 0, %s285
      %s286 = sphi 0, %s283
      %s287 = sphi 0, %s286
      %s303 = sphi 0, %s287
      %s317 = sphi 0, %s319
      %s320 = sphi 0, %s317
      %s321 = sphi 0, %s320
      %s337 = sphi 0, %s321
      %s345 = sphi 0, %s347
      %s348 = sphi 0, %s345
      %s349 = sphi 0, %s348
      %s365 = sphi 0, %s349
    $region4: #{tpu_custom_call.1} parent=1 // loop_header_branch
      %36 = sbr.rel (%p34) target = $region8
    $region5: #{tpu_custom_call.1} parent=1 // loop_body
      %s38 = ssub.s32 %s33, 1
      %s39 = ssub.s32 %s33, 2
      %s46 = sadd.s32 1, %s41
      %p47 = scmp.ge.s32.totalorder %s46, 2
      %s48 = scalar_select %p47, 0, %s46
      %s49 = sadd.s32 1, %s40
      %s50 = scalar_select %p47, %s49, %s40
      %p51 = scmp.ge.s32.totalorder %s50, 2
      %s52 = scalar_select %p51, 0, %s50
      %s53 = ssub.s32 %s40, %s52
      %s54 = ssub.s32 %s41, %s48
      %s55 = sor.u32 %s53, %s54
      %p56 = scmp.eq.s32.totalorder %s55, 0
      %s58 = sadd.s32 %s57, 1
      %s59 = scalar_select %p56, %s57, %s58
      %p62 = pneg %p56
      %p63 = scmp.eq.s32.totalorder %s33, 3
      %p64 = por %p62, %p63
      %p65 = scmp.ne.s32.totalorder %s57, %s60
      %p66 = scmp.eq.s32.totalorder %s33, 0
      %p67 = por %p65, %p66
      %p68 = scmp.ne.s32.totalorder %s57, %s60
      %p69 = scmp.eq.s32.totalorder %s38, 3
      %p70 = por %p68, %p69
      %p71 = scmp.ne.s32.totalorder %s60, %s61
      %p72 = scmp.eq.s32.totalorder %s38, 0
      %p73 = por %p71, %p72
      %p74 = scmp.ne.s32.totalorder %s60, %s61
      %p75 = scmp.eq.s32.totalorder %s39, 3
      %p76 = por %p74, %p75
      %p78 = scmp.ne.s32.totalorder %s61, %s77
      %p79 = scmp.eq.s32.totalorder %s39, 0
      %p80 = por %p78, %p79
      %s81 = ssub.s32 %s41, 1
      %p82 = scmp.gt.s32.totalorder %s81, 0
      %s83 = scalar_select %p82, %s81, 0
      %s84 = ssub.s32 %s48, 1
      %p85 = scmp.gt.s32.totalorder %s84, 0
      %s86 = scalar_select %p85, %s84, 0
      %s87 = ssub.s32 %s40, %s52
      %s88 = ssub.s32 %s83, %s86
      %s89 = sor.u32 %s87, %s88
      %p90 = scmp.eq.s32.totalorder %s89, 0
      %s92 = sadd.s32 %s91, 1
      %s93 = scalar_select %p90, %s91, %s92
      %p96 = pneg %p90
      %p97 = scmp.eq.s32.totalorder %s33, 3
      %p98 = por %p96, %p97
      %p99 = scmp.ne.s32.totalorder %s91, %s94
      %p100 = scmp.eq.s32.totalorder %s33, 0
      %p101 = por %p99, %p100
      %p102 = scmp.ne.s32.totalorder %s91, %s94
      %p103 = scmp.eq.s32.totalorder %s38, 3
      %p104 = por %p102, %p103
      %p105 = scmp.ne.s32.totalorder %s94, %s95
      %p106 = scmp.eq.s32.totalorder %s38, 0
      %p107 = por %p105, %p106
      %p108 = scmp.ne.s32.totalorder %s94, %s95
      %p109 = scmp.eq.s32.totalorder %s39, 3
      %p110 = por %p108, %p109
      %p112 = scmp.ne.s32.totalorder %s95, %s111
      %p113 = scmp.eq.s32.totalorder %s39, 0
      %p114 = por %p112, %p113
      %s115 = sadd.s32 %s41, 1
      %p116 = scmp.lt.s32.totalorder %s115, 1
      %s117 = scalar_select %p116, %s115, 1
      %s118 = sadd.s32 %s48, 1
      %p119 = scmp.lt.s32.totalorder %s118, 1
      %s120 = scalar_select %p119, %s118, 1
      %s121 = ssub.s32 %s40, %s52
      %s122 = ssub.s32 %s117, %s120
      %s123 = sor.u32 %s121, %s122
      %p124 = scmp.eq.s32.totalorder %s123, 0
      %s126 = sadd.s32 %s125, 1
      %s127 = scalar_select %p124, %s125, %s126
      %p130 = pneg %p124
      %p131 = scmp.eq.s32.totalorder %s33, 3
      %p132 = por %p130, %p131
      %p133 = scmp.ne.s32.totalorder %s125, %s128
      %p134 = scmp.eq.s32.totalorder %s33, 0
      %p135 = por %p133, %p134
      %p136 = scmp.ne.s32.totalorder %s125, %s128
      %p137 = scmp.eq.s32.totalorder %s38, 3
      %p138 = por %p136, %p137
      %p139 = scmp.ne.s32.totalorder %s128, %s129
      %p140 = scmp.eq.s32.totalorder %s38, 0
      %p141 = por %p139, %p140
      %p142 = scmp.ne.s32.totalorder %s128, %s129
      %p143 = scmp.eq.s32.totalorder %s39, 3
      %p144 = por %p142, %p143
      %p146 = scmp.ne.s32.totalorder %s129, %s145
      %p147 = scmp.eq.s32.totalorder %s39, 0
      %p148 = por %p146, %p147
      %s149 = ssub.s32 %s40, %s52
      %s150 = ssub.s32 %s41, %s48
      %s151 = sor.u32 %s149, %s150
      %p152 = scmp.eq.s32.totalorder %s151, 0
      %s154 = sadd.s32 %s153, 1
      %s155 = scalar_select %p152, %s153, %s154
      %p158 = pneg %p152
      %p159 = scmp.eq.s32.totalorder %s33, 3
      %p160 = por %p158, %p159
      %p161 = scmp.ne.s32.totalorder %s153, %s156
      %p162 = scmp.eq.s32.totalorder %s33, 0
      %p163 = por %p161, %p162
      %p164 = scmp.ne.s32.totalorder %s153, %s156
      %p165 = scmp.eq.s32.totalorder %s38, 3
      %p166 = por %p164, %p165
      %p167 = scmp.ne.s32.totalorder %s156, %s157
      %p168 = scmp.eq.s32.totalorder %s38, 0
      %p169 = por %p167, %p168
      %p170 = scmp.ne.s32.totalorder %s156, %s157
      %p171 = scmp.eq.s32.totalorder %s39, 3
      %p172 = por %p170, %p171
      %p174 = scmp.ne.s32.totalorder %s157, %s173
      %p175 = scmp.eq.s32.totalorder %s39, 0
      %p176 = por %p174, %p175
      %s177 = ssub.s32 %s41, 1
      %p178 = scmp.gt.s32.totalorder %s177, 0
      %s179 = scalar_select %p178, %s177, 0
      %s180 = ssub.s32 %s48, 1
      %p181 = scmp.gt.s32.totalorder %s180, 0
      %s182 = scalar_select %p181, %s180, 0
      %s183 = ssub.s32 %s40, %s52
      %s184 = ssub.s32 %s179, %s182
      %s185 = sor.u32 %s183, %s184
      %p186 = scmp.eq.s32.totalorder %s185, 0
      %s188 = sadd.s32 %s187, 1
      %s189 = scalar_select %p186, %s187, %s188
      %p192 = pneg %p186
      %p193 = scmp.eq.s32.totalorder %s33, 3
      %p194 = por %p192, %p193
      %p195 = scmp.ne.s32.totalorder %s187, %s190
      %p196 = scmp.eq.s32.totalorder %s33, 0
      %p197 = por %p195, %p196
      %p198 = scmp.ne.s32.totalorder %s187, %s190
      %p199 = scmp.eq.s32.totalorder %s38, 3
      %p200 = por %p198, %p199
      %p201 = scmp.ne.s32.totalorder %s190, %s191
      %p202 = scmp.eq.s32.totalorder %s38, 0
      %p203 = por %p201, %p202
      %p204 = scmp.ne.s32.totalorder %s190, %s191
      %p205 = scmp.eq.s32.totalorder %s39, 3
      %p206 = por %p204, %p205
      %p208 = scmp.ne.s32.totalorder %s191, %s207
      %p209 = scmp.eq.s32.totalorder %s39, 0
      %p210 = por %p208, %p209
      %s211 = sadd.s32 %s41, 1
      %p212 = scmp.lt.s32.totalorder %s211, 1
      %s213 = scalar_select %p212, %s211, 1
      %s214 = sadd.s32 %s48, 1
      %p215 = scmp.lt.s32.totalorder %s214, 1
      %s216 = scalar_select %p215, %s214, 1
      %s217 = ssub.s32 %s40, %s52
      %s218 = ssub.s32 %s213, %s216
      %s219 = sor.u32 %s217, %s218
      %p220 = scmp.eq.s32.totalorder %s219, 0
      %s222 = sadd.s32 %s221, 1
      %s223 = scalar_select %p220, %s221, %s222
      %p226 = pneg %p220
      %p227 = scmp.eq.s32.totalorder %s33, 3
      %p228 = por %p226, %p227
      %p229 = scmp.ne.s32.totalorder %s221, %s224
      %p230 = scmp.eq.s32.totalorder %s33, 0
      %p231 = por %p229, %p230
      %p232 = scmp.ne.s32.totalorder %s221, %s224
      %p233 = scmp.eq.s32.totalorder %s38, 3
      %p234 = por %p232, %p233
      %p235 = scmp.ne.s32.totalorder %s224, %s225
      %p236 = scmp.eq.s32.totalorder %s38, 0
      %p237 = por %p235, %p236
      %p238 = scmp.ne.s32.totalorder %s224, %s225
      %p239 = scmp.eq.s32.totalorder %s39, 3
      %p240 = por %p238, %p239
      %p242 = scmp.ne.s32.totalorder %s225, %s241
      %p243 = scmp.eq.s32.totalorder %s39, 0
      %p244 = por %p242, %p243
      %s245 = ssub.s32 %s40, %s52
      %s246 = ssub.s32 %s41, %s48
      %s247 = sor.u32 %s245, %s246
      %p248 = scmp.eq.s32.totalorder %s247, 0
      %s250 = sadd.s32 %s249, 1
      %s251 = scalar_select %p248, %s249, %s250
      %p254 = pneg %p248
      %p255 = scmp.eq.s32.totalorder %s33, 3
      %p256 = por %p254, %p255
      %p257 = scmp.ne.s32.totalorder %s249, %s252
      %p258 = scmp.eq.s32.totalorder %s33, 0
      %p259 = por %p257, %p258
      %p260 = scmp.ne.s32.totalorder %s249, %s252
      %p261 = scmp.eq.s32.totalorder %s38, 3
      %p262 = por %p260, %p261
      %p263 = scmp.ne.s32.totalorder %s252, %s253
      %p264 = scmp.eq.s32.totalorder %s38, 0
      %p265 = por %p263, %p264
      %p266 = scmp.ne.s32.totalorder %s252, %s253
      %p267 = scmp.eq.s32.totalorder %s39, 3
      %p268 = por %p266, %p267
      %p270 = scmp.ne.s32.totalorder %s253, %s269
      %p271 = scmp.eq.s32.totalorder %s39, 0
      %p272 = por %p270, %p271
      %s273 = ssub.s32 %s41, 1
      %p274 = scmp.gt.s32.totalorder %s273, 0
      %s275 = scalar_select %p274, %s273, 0
      %s276 = ssub.s32 %s48, 1
      %p277 = scmp.gt.s32.totalorder %s276, 0
      %s278 = scalar_select %p277, %s276, 0
      %s279 = ssub.s32 %s40, %s52
      %s280 = ssub.s32 %s275, %s278
      %s281 = sor.u32 %s279, %s280
      %p282 = scmp.eq.s32.totalorder %s281, 0
      %s284 = sadd.s32 %s283, 1
      %s285 = scalar_select %p282, %s283, %s284
      %p288 = pneg %p282
      %p289 = scmp.eq.s32.totalorder %s33, 3
      %p290 = por %p288, %p289
      %p291 = scmp.ne.s32.totalorder %s283, %s286
      %p292 = scmp.eq.s32.totalorder %s33, 0
      %p293 = por %p291, %p292
      %p294 = scmp.ne.s32.totalorder %s283, %s286
      %p295 = scmp.eq.s32.totalorder %s38, 3
      %p296 = por %p294, %p295
      %p297 = scmp.ne.s32.totalorder %s286, %s287
      %p298 = scmp.eq.s32.totalorder %s38, 0
      %p299 = por %p297, %p298
      %p300 = scmp.ne.s32.totalorder %s286, %s287
      %p301 = scmp.eq.s32.totalorder %s39, 3
      %p302 = por %p300, %p301
      %p304 = scmp.ne.s32.totalorder %s287, %s303
      %p305 = scmp.eq.s32.totalorder %s39, 0
      %p306 = por %p304, %p305
      %s307 = sadd.s32 %s41, 1
      %p308 = scmp.lt.s32.totalorder %s307, 1
      %s309 = scalar_select %p308, %s307, 1
      %s310 = sadd.s32 %s48, 1
      %p311 = scmp.lt.s32.totalorder %s310, 1
      %s312 = scalar_select %p311, %s310, 1
      %s313 = ssub.s32 %s40, %s52
      %s314 = ssub.s32 %s309, %s312
      %s315 = sor.u32 %s313, %s314
      %p316 = scmp.eq.s32.totalorder %s315, 0
      %s318 = sadd.s32 %s317, 1
      %s319 = scalar_select %p316, %s317, %s318
      %p322 = pneg %p316
      %p323 = scmp.eq.s32.totalorder %s33, 3
      %p324 = por %p322, %p323
      %p325 = scmp.ne.s32.totalorder %s317, %s320
      %p326 = scmp.eq.s32.totalorder %s33, 0
      %p327 = por %p325, %p326
      %p328 = scmp.ne.s32.totalorder %s317, %s320
      %p329 = scmp.eq.s32.totalorder %s38, 3
      %p330 = por %p328, %p329
      %p331 = scmp.ne.s32.totalorder %s320, %s321
      %p332 = scmp.eq.s32.totalorder %s38, 0
      %p333 = por %p331, %p332
      %p334 = scmp.ne.s32.totalorder %s320, %s321
      %p335 = scmp.eq.s32.totalorder %s39, 3
      %p336 = por %p334, %p335
      %p338 = scmp.ne.s32.totalorder %s321, %s337
      %p339 = scmp.eq.s32.totalorder %s39, 0
      %p340 = por %p338, %p339
      %s341 = ssub.s32 %s40, %s52
      %s342 = ssub.s32 %s41, %s48
      %s343 = sor.u32 %s341, %s342
      %p344 = scmp.eq.s32.totalorder %s343, 0
      %s346 = sadd.s32 %s345, 1
      %s347 = scalar_select %p344, %s345, %s346
      %p350 = pneg %p344
      %p351 = scmp.eq.s32.totalorder %s33, 3
      %p352 = por %p350, %p351
      %p353 = scmp.ne.s32.totalorder %s345, %s348
      %p354 = scmp.eq.s32.totalorder %s33, 0
      %p355 = por %p353, %p354
      %p356 = scmp.ne.s32.totalorder %s345, %s348
      %p357 = scmp.eq.s32.totalorder %s38, 3
      %p358 = por %p356, %p357
      %p359 = scmp.ne.s32.totalorder %s348, %s349
      %p360 = scmp.eq.s32.totalorder %s38, 0
      %p361 = por %p359, %p360
      %p362 = scmp.ne.s32.totalorder %s348, %s349
      %p363 = scmp.eq.s32.totalorder %s39, 3
      %p364 = por %p362, %p363
      %p366 = scmp.ne.s32.totalorder %s349, %s365
      %p367 = scmp.eq.s32.totalorder %s39, 0
      %p368 = por %p366, %p367
      %p369 = scmp.le.s32.totalorder 1, %s33
      %p370 = scmp.lt.s32.totalorder %s33, 5
      %p371 = pnand %p369, %p370
      %p372 = pneg %p371
      // Predicated region
      $region9: #{tpu_custom_call.1} parent=5 // pred_check
        _
      $region10: #{tpu_custom_call.1} parent=5 // pred_check_branch
        %374 = sbr.rel (%p371) target = $region12
      $region11: #{tpu_custom_call.1} parent=5 // pred_region
        %s375 = ssub.s32 %s33, 1
      $region12: #{tpu_custom_call.1} parent=5 // pred_fallthru
        _
      %p376 = scmp.lt.s32.totalorder %s33, 4
      // Predicated region
      $region13: #{tpu_custom_call.1} parent=5 // pred_check
        %p377 = pneg %p376
      $region14: #{tpu_custom_call.1} parent=5 // pred_check_branch
        %379 = sbr.rel (%p377) target = $region16
      $region15: #{tpu_custom_call.1} parent=5 // pred_region
        // Predicated region
        $region17: #{tpu_custom_call.1} parent=15 // pred_check
          %p380 = pneg %p67
        $region18: #{tpu_custom_call.1} parent=15 // pred_check_branch
          %382 = sbr.rel (%p380) target = $region20
        $region19: #{tpu_custom_call.1} parent=15 // pred_region
          %s383 = sand.u32 %s57, 1
          %s384 = scalar_lea.sflag [#allocation3], %s383
          %s385 = sand.u32 %s57, 1
          %s386 = smul.addr %s385, 8
          %s387 = scalar_lea.vmem [#allocation2], %s386
          %389 = vsyncadd %s384, 0
          %s390 = smul.addr %s40, 2
          %s391 = sadd.s32 %s41, %s390
          %s392 = smul.addr %s391, 8
          %s393 = scalar_lea.hbm %s0, %s392
          %s395 = sshll.u32 %s393, 4
          %s396 = int_to_ptr.hbm [resolvable:$true] %s395
          %s397 = sshll.u32 %s387, 4
          %s398 = int_to_ptr.vmem [resolvable:$true] %s397
          %400 = dma.hbm_to_vmem [thread:$0]  %s396, 128, %s398, %s384
        $region20: #{tpu_custom_call.1} parent=15 // pred_fallthru
          _
        // Predicated region
        $region21: #{tpu_custom_call.1} parent=15 // pred_check
          %p401 = pneg %p101
        $region22: #{tpu_custom_call.1} parent=15 // pred_check_branch
          %403 = sbr.rel (%p401) target = $region24
        $region23: #{tpu_custom_call.1} parent=15 // pred_region
          %s404 = sand.u32 %s33, 1
          %s405 = scalar_lea.sflag [#allocation6], %s404
          %s406 = sand.u32 %s91, 1
          %s407 = smul.addr %s406, 8
          %s408 = scalar_lea.vmem [#allocation5], %s407
          %s409 = ssub.s32 %s41, 1
          %p410 = scmp.gt.s32.totalorder %s409, 0
          %s411 = scalar_select %p410, %s409, 0
          %413 = vsyncadd %s405, 0
          %s414 = smul.addr %s40, 2
          %s415 = sadd.s32 %s411, %s414
          %s416 = smul.addr %s415, 8
          %s417 = scalar_lea.hbm %s1, %s416
          %s419 = sshll.u32 %s417, 4
          %s420 = int_to_ptr.hbm [resolvable:$true] %s419
          %s421 = sshll.u32 %s408, 4
          %s422 = int_to_ptr.vmem [resolvable:$true] %s421
          %424 = dma.hbm_to_vmem [thread:$0]  %s420, 128, %s422, %s405
        $region24: #{tpu_custom_call.1} parent=15 // pred_fallthru
          _
        // Predicated region
        $region25: #{tpu_custom_call.1} parent=15 // pred_check
          %p425 = pneg %p135
        $region26: #{tpu_custom_call.1} parent=15 // pred_check_branch
          %427 = sbr.rel (%p425) target = $region28
        $region27: #{tpu_custom_call.1} parent=15 // pred_region
          %s428 = sand.u32 %s33, 1
          %s429 = scalar_lea.sflag [#allocation6], %s428
          %s430 = sand.u32 %s125, 1
          %s431 = smul.addr %s430, 8
          %s432 = scalar_lea.vmem [#allocation7], %s431
          %s433 = sadd.s32 %s41, 1
          %p434 = scmp.lt.s32.totalorder %s433, 1
          %s435 = scalar_select %p434, %s433, 1
          %437 = vsyncadd %s429, 0
          %s438 = smul.addr %s40, 2
          %s439 = sadd.s32 %s435, %s438
          %s440 = smul.addr %s439, 8
          %s441 = scalar_lea.hbm %s2, %s440
          %s443 = sshll.u32 %s441, 4
          %s444 = int_to_ptr.hbm [resolvable:$true] %s443
          %s445 = sshll.u32 %s432, 4
          %s446 = int_to_ptr.vmem [resolvable:$true] %s445
          %448 = dma.hbm_to_vmem [thread:$0]  %s444, 128, %s446, %s429
        $region28: #{tpu_custom_call.1} parent=15 // pred_fallthru
          _
        // Predicated region
        $region29: #{tpu_custom_call.1} parent=15 // pred_check
          %p449 = pneg %p163
        $region30: #{tpu_custom_call.1} parent=15 // pred_check_branch
          %451 = sbr.rel (%p449) target = $region32
        $region31: #{tpu_custom_call.1} parent=15 // pred_region
          %s452 = sand.u32 %s33, 1
          %s453 = scalar_lea.sflag [#allocation9], %s452
          %s454 = sand.u32 %s153, 1
          %s455 = smul.addr %s454, 8
          %s456 = scalar_lea.vmem [#allocation8], %s455
          %458 = vsyncadd %s453, 0
          %s459 = smul.addr %s40, 2
          %s460 = sadd.s32 %s41, %s459
          %s461 = smul.addr %s460, 8
          %s462 = scalar_lea.hbm %s3, %s461
          %s464 = sshll.u32 %s462, 4
          %s465 = int_to_ptr.hbm [resolvable:$true] %s464
          %s466 = sshll.u32 %s456, 4
          %s467 = int_to_ptr.vmem [resolvable:$true] %s466
          %469 = dma.hbm_to_vmem [thread:$0]  %s465, 128, %s467, %s453
        $region32: #{tpu_custom_call.1} parent=15 // pred_fallthru
          _
        // Predicated region
        $region33: #{tpu_custom_call.1} parent=15 // pred_check
          %p470 = pneg %p197
        $region34: #{tpu_custom_call.1} parent=15 // pred_check_branch
          %472 = sbr.rel (%p470) target = $region36
        $region35: #{tpu_custom_call.1} parent=15 // pred_region
          %s473 = sand.u32 %s33, 1
          %s474 = scalar_lea.sflag [#allocation9], %s473
          %s475 = sand.u32 %s187, 1
          %s476 = smul.addr %s475, 8
          %s477 = scalar_lea.vmem [#allocation10], %s476
          %s478 = ssub.s32 %s41, 1
          %p479 = scmp.gt.s32.totalorder %s478, 0
          %s480 = scalar_select %p479, %s478, 0
          %482 = vsyncadd %s474, 0
          %s483 = smul.addr %s40, 2
          %s484 = sadd.s32 %s480, %s483
          %s485 = smul.addr %s484, 8
          %s486 = scalar_lea.hbm %s4, %s485
          %s488 = sshll.u32 %s486, 4
          %s489 = int_to_ptr.hbm [resolvable:$true] %s488
          %s490 = sshll.u32 %s477, 4
          %s491 = int_to_ptr.vmem [resolvable:$true] %s490
          %493 = dma.hbm_to_vmem [thread:$0]  %s489, 128, %s491, %s474
        $region36: #{tpu_custom_call.1} parent=15 // pred_fallthru
          _
        // Predicated region
        $region37: #{tpu_custom_call.1} parent=15 // pred_check
          %p494 = pneg %p231
        $region38: #{tpu_custom_call.1} parent=15 // pred_check_branch
          %496 = sbr.rel (%p494) target = $region40
        $region39: #{tpu_custom_call.1} parent=15 // pred_region
          %s497 = sand.u32 %s33, 1
          %s498 = scalar_lea.sflag [#allocation12], %s497
          %s499 = sand.u32 %s221, 1
          %s500 = smul.addr %s499, 8
          %s501 = scalar_lea.vmem [#allocation11], %s500
          %s502 = sadd.s32 %s41, 1
          %p503 = scmp.lt.s32.totalorder %s502, 1
          %s504 = scalar_select %p503, %s502, 1
          %506 = vsyncadd %s498, 0
          %s507 = smul.addr %s40, 2
          %s508 = sadd.s32 %s504, %s507
          %s509 = smul.addr %s508, 8
          %s510 = scalar_lea.hbm %s5, %s509
          %s512 = sshll.u32 %s510, 4
          %s513 = int_to_ptr.hbm [resolvable:$true] %s512
          %s514 = sshll.u32 %s501, 4
          %s515 = int_to_ptr.vmem [resolvable:$true] %s514
          %517 = dma.hbm_to_vmem [thread:$0]  %s513, 128, %s515, %s498
        $region40: #{tpu_custom_call.1} parent=15 // pred_fallthru
          _
        // Predicated region
        $region41: #{tpu_custom_call.1} parent=15 // pred_check
          %p518 = pneg %p259
        $region42: #{tpu_custom_call.1} parent=15 // pred_check_branch
          %520 = sbr.rel (%p518) target = $region44
        $region43: #{tpu_custom_call.1} parent=15 // pred_region
          %s521 = sand.u32 %s33, 1
          %s522 = scalar_lea.sflag [#allocation12], %s521
          %s523 = sand.u32 %s249, 1
          %s524 = smul.addr %s523, 8
          %s525 = scalar_lea.vmem [#allocation13], %s524
          %527 = vsyncadd %s522, 0
          %s528 = smul.addr %s40, 2
          %s529 = sadd.s32 %s41, %s528
          %s530 = smul.addr %s529, 8
          %s531 = scalar_lea.hbm %s6, %s530
          %s533 = sshll.u32 %s531, 4
          %s534 = int_to_ptr.hbm [resolvable:$true] %s533
          %s535 = sshll.u32 %s525, 4
          %s536 = int_to_ptr.vmem [resolvable:$true] %s535
          %538 = dma.hbm_to_vmem [thread:$0]  %s534, 128, %s536, %s522
        $region44: #{tpu_custom_call.1} parent=15 // pred_fallthru
          _
        // Predicated region
        $region45: #{tpu_custom_call.1} parent=15 // pred_check
          %p539 = pneg %p293
        $region46: #{tpu_custom_call.1} parent=15 // pred_check_branch
          %541 = sbr.rel (%p539) target = $region48
        $region47: #{tpu_custom_call.1} parent=15 // pred_region
          %s542 = sand.u32 %s33, 1
          %s543 = scalar_lea.sflag [#allocation15], %s542
          %s544 = sand.u32 %s283, 1
          %s545 = smul.addr %s544, 8
          %s546 = scalar_lea.vmem [#allocation14], %s545
          %s547 = ssub.s32 %s41, 1
          %p548 = scmp.gt.s32.totalorder %s547, 0
          %s549 = scalar_select %p548, %s547, 0
          %551 = vsyncadd %s543, 0
          %s552 = smul.addr %s40, 2
          %s553 = sadd.s32 %s549, %s552
          %s554 = smul.addr %s553, 8
          %s555 = scalar_lea.hbm %s7, %s554
          %s557 = sshll.u32 %s555, 4
          %s558 = int_to_ptr.hbm [resolvable:$true] %s557
          %s559 = sshll.u32 %s546, 4
          %s560 = int_to_ptr.vmem [resolvable:$true] %s559
          %562 = dma.hbm_to_vmem [thread:$0]  %s558, 128, %s560, %s543
        $region48: #{tpu_custom_call.1} parent=15 // pred_fallthru
          _
        // Predicated region
        $region49: #{tpu_custom_call.1} parent=15 // pred_check
          %p563 = pneg %p327
        $region50: #{tpu_custom_call.1} parent=15 // pred_check_branch
          %565 = sbr.rel (%p563) target = $region52
        $region51: #{tpu_custom_call.1} parent=15 // pred_region
          %s566 = sand.u32 %s33, 1
          %s567 = scalar_lea.sflag [#allocation15], %s566
          %s568 = sand.u32 %s317, 1
          %s569 = smul.addr %s568, 8
          %s570 = scalar_lea.vmem [#allocation16], %s569
          %s571 = sadd.s32 %s41, 1
          %p572 = scmp.lt.s32.totalorder %s571, 1
          %s573 = scalar_select %p572, %s571, 1
          %575 = vsyncadd %s567, 0
          %s576 = smul.addr %s40, 2
          %s577 = sadd.s32 %s573, %s576
          %s578 = smul.addr %s577, 8
          %s579 = scalar_lea.hbm %s8, %s578
          %s581 = sshll.u32 %s579, 4
          %s582 = int_to_ptr.hbm [resolvable:$true] %s581
          %s583 = sshll.u32 %s570, 4
          %s584 = int_to_ptr.vmem [resolvable:$true] %s583
          %586 = dma.hbm_to_vmem [thread:$0]  %s582, 128, %s584, %s567
        $region52: #{tpu_custom_call.1} parent=15 // pred_fallthru
          _
      $region16: #{tpu_custom_call.1} parent=5 // pred_fallthru
        _
      %p587 = scmp.le.s32.totalorder 1, %s33
      %p588 = scmp.lt.s32.totalorder %s33, 5
      %p589 = pnand %p587, %p588
      %p590 = pneg %p589
      // Predicated region
      $region53: #{tpu_custom_call.1} parent=5 // pred_check
        _
      $region54: #{tpu_custom_call.1} parent=5 // pred_check_branch
        %592 = sbr.rel (%p589) target = $region56
      $region55: #{tpu_custom_call.1} parent=5 // pred_region
        %s593 = ssub.s32 %s33, 1
        %s594 = sand.u32 %s60, 1
        %s595 = scalar_lea.sflag [#allocation3], %s594
        %s596 = sand.u32 %s60, 1
        %s597 = smul.addr %s596, 8
        %s598 = scalar_lea.vmem [#allocation2], %s597
        // Predicated region
        $region57: #{tpu_custom_call.1} parent=55 // pred_check
          %p599 = pneg %p73
        $region58: #{tpu_custom_call.1} parent=55 // pred_check_branch
          %601 = sbr.rel (%p599) target = $region60
        $region59: #{tpu_custom_call.1} parent=55 // pred_region
          %603 = dma.done %s595, 128
        $region60: #{tpu_custom_call.1} parent=55 // pred_fallthru
          _
        %s604 = sand.u32 %s38, 1
        %s605 = scalar_lea.sflag [#allocation6], %s604
        %s606 = sand.u32 %s94, 1
        %s607 = smul.addr %s606, 8
        %s608 = scalar_lea.vmem [#allocation5], %s607
        // Predicated region
        $region61: #{tpu_custom_call.1} parent=55 // pred_check
          %p609 = pneg %p107
        $region62: #{tpu_custom_call.1} parent=55 // pred_check_branch
          %611 = sbr.rel (%p609) target = $region64
        $region63: #{tpu_custom_call.1} parent=55 // pred_region
          %613 = dma.done %s605, 128
        $region64: #{tpu_custom_call.1} parent=55 // pred_fallthru
          _
        %s614 = sand.u32 %s38, 1
        %s615 = scalar_lea.sflag [#allocation6], %s614
        %s616 = sand.u32 %s128, 1
        %s617 = smul.addr %s616, 8
        %s618 = scalar_lea.vmem [#allocation7], %s617
        // Predicated region
        $region65: #{tpu_custom_call.1} parent=55 // pred_check
          %p619 = pneg %p141
        $region66: #{tpu_custom_call.1} parent=55 // pred_check_branch
          %621 = sbr.rel (%p619) target = $region68
        $region67: #{tpu_custom_call.1} parent=55 // pred_region
          %623 = dma.done %s615, 128
        $region68: #{tpu_custom_call.1} parent=55 // pred_fallthru
          _
        %s624 = sand.u32 %s38, 1
        %s625 = scalar_lea.sflag [#allocation9], %s624
        %s626 = sand.u32 %s156, 1
        %s627 = smul.addr %s626, 8
        %s628 = scalar_lea.vmem [#allocation8], %s627
        // Predicated region
        $region69: #{tpu_custom_call.1} parent=55 // pred_check
          %p629 = pneg %p169
        $region70: #{tpu_custom_call.1} parent=55 // pred_check_branch
          %631 = sbr.rel (%p629) target = $region72
        $region71: #{tpu_custom_call.1} parent=55 // pred_region
          %633 = dma.done %s625, 128
        $region72: #{tpu_custom_call.1} parent=55 // pred_fallthru
          _
        %s634 = sand.u32 %s38, 1
        %s635 = scalar_lea.sflag [#allocation9], %s634
        %s636 = sand.u32 %s190, 1
        %s637 = smul.addr %s636, 8
        %s638 = scalar_lea.vmem [#allocation10], %s637
        // Predicated region
        $region73: #{tpu_custom_call.1} parent=55 // pred_check
          %p639 = pneg %p203
        $region74: #{tpu_custom_call.1} parent=55 // pred_check_branch
          %641 = sbr.rel (%p639) target = $region76
        $region75: #{tpu_custom_call.1} parent=55 // pred_region
          %643 = dma.done %s635, 128
        $region76: #{tpu_custom_call.1} parent=55 // pred_fallthru
          _
        %s644 = sand.u32 %s38, 1
        %s645 = scalar_lea.sflag [#allocation12], %s644
        %s646 = sand.u32 %s224, 1
        %s647 = smul.addr %s646, 8
        %s648 = scalar_lea.vmem [#allocation11], %s647
        // Predicated region
        $region77: #{tpu_custom_call.1} parent=55 // pred_check
          %p649 = pneg %p237
        $region78: #{tpu_custom_call.1} parent=55 // pred_check_branch
          %651 = sbr.rel (%p649) target = $region80
        $region79: #{tpu_custom_call.1} parent=55 // pred_region
          %653 = dma.done %s645, 128
        $region80: #{tpu_custom_call.1} parent=55 // pred_fallthru
          _
        %s654 = sand.u32 %s38, 1
        %s655 = scalar_lea.sflag [#allocation12], %s654
        %s656 = sand.u32 %s252, 1
        %s657 = smul.addr %s656, 8
        %s658 = scalar_lea.vmem [#allocation13], %s657
        // Predicated region
        $region81: #{tpu_custom_call.1} parent=55 // pred_check
          %p659 = pneg %p265
        $region82: #{tpu_custom_call.1} parent=55 // pred_check_branch
          %661 = sbr.rel (%p659) target = $region84
        $region83: #{tpu_custom_call.1} parent=55 // pred_region
          %663 = dma.done %s655, 128
        $region84: #{tpu_custom_call.1} parent=55 // pred_fallthru
          _
        %s664 = sand.u32 %s38, 1
        %s665 = scalar_lea.sflag [#allocation15], %s664
        %s666 = sand.u32 %s286, 1
        %s667 = smul.addr %s666, 8
        %s668 = scalar_lea.vmem [#allocation14], %s667
        // Predicated region
        $region85: #{tpu_custom_call.1} parent=55 // pred_check
          %p669 = pneg %p299
        $region86: #{tpu_custom_call.1} parent=55 // pred_check_branch
          %671 = sbr.rel (%p669) target = $region88
        $region87: #{tpu_custom_call.1} parent=55 // pred_region
          %673 = dma.done %s665, 128
        $region88: #{tpu_custom_call.1} parent=55 // pred_fallthru
          _
        %s674 = sand.u32 %s38, 1
        %s675 = scalar_lea.sflag [#allocation15], %s674
        %s676 = sand.u32 %s320, 1
        %s677 = smul.addr %s676, 8
        %s678 = scalar_lea.vmem [#allocation16], %s677
        // Predicated region
        $region89: #{tpu_custom_call.1} parent=55 // pred_check
          %p679 = pneg %p333
        $region90: #{tpu_custom_call.1} parent=55 // pred_check_branch
          %681 = sbr.rel (%p679) target = $region92
        $region91: #{tpu_custom_call.1} parent=55 // pred_region
          %683 = dma.done %s675, 128
        $region92: #{tpu_custom_call.1} parent=55 // pred_fallthru
          _
        %s684 = sand.u32 %s60, 1
        %s685 = scalar_lea.sflag [#allocation3], %s684
        %s686 = sand.u32 %s60, 1
        %s687 = smul.addr %s686, 8
        %s688 = scalar_lea.vmem [#allocation2], %s687
        %p689 = pneg %p73
        %p690 = pneg %p70
        %s691 = sand.u32 %s38, 1
        %s692 = scalar_lea.sflag [#allocation6], %s691
        %s693 = sand.u32 %s94, 1
        %s694 = smul.addr %s693, 8
        %s695 = scalar_lea.vmem [#allocation5], %s694
        %p696 = pneg %p107
        %p697 = pneg %p104
        %s698 = sand.u32 %s38, 1
        %s699 = scalar_lea.sflag [#allocation6], %s698
        %s700 = sand.u32 %s128, 1
        %s701 = smul.addr %s700, 8
        %s702 = scalar_lea.vmem [#allocation7], %s701
        %p703 = pneg %p141
        %p704 = pneg %p138
        %s705 = sand.u32 %s38, 1
        %s706 = scalar_lea.sflag [#allocation9], %s705
        %s707 = sand.u32 %s156, 1
        %s708 = smul.addr %s707, 8
        %s709 = scalar_lea.vmem [#allocation8], %s708
        %p710 = pneg %p169
        %p711 = pneg %p166
        %s712 = sand.u32 %s38, 1
        %s713 = scalar_lea.sflag [#allocation9], %s712
        %s714 = sand.u32 %s190, 1
        %s715 = smul.addr %s714, 8
        %s716 = scalar_lea.vmem [#allocation10], %s715
        %p717 = pneg %p203
        %p718 = pneg %p200
        %s719 = sand.u32 %s38, 1
        %s720 = scalar_lea.sflag [#allocation12], %s719
        %s721 = sand.u32 %s224, 1
        %s722 = smul.addr %s721, 8
        %s723 = scalar_lea.vmem [#allocation11], %s722
        %p724 = pneg %p237
        %p725 = pneg %p234
        %s726 = sand.u32 %s38, 1
        %s727 = scalar_lea.sflag [#allocation12], %s726
        %s728 = sand.u32 %s252, 1
        %s729 = smul.addr %s728, 8
        %s730 = scalar_lea.vmem [#allocation13], %s729
        %p731 = pneg %p265
        %p732 = pneg %p262
        %s733 = sand.u32 %s38, 1
        %s734 = scalar_lea.sflag [#allocation15], %s733
        %s735 = sand.u32 %s286, 1
        %s736 = smul.addr %s735, 8
        %s737 = scalar_lea.vmem [#allocation14], %s736
        %p738 = pneg %p299
        %p739 = pneg %p296
        %s740 = sand.u32 %s38, 1
        %s741 = scalar_lea.sflag [#allocation15], %s740
        %s742 = sand.u32 %s320, 1
        %s743 = smul.addr %s742, 8
        %s744 = scalar_lea.vmem [#allocation16], %s743
        %p745 = pneg %p333
        %p746 = pneg %p330
        %p747 = pneg %p361
        %p748 = pneg %p358
        %s749 = sand.u32 %s348, 1
        %s750 = scalar_lea.sflag [#allocation4], %s749
        %s751 = sand.u32 %s348, 1
        %s752 = smul.addr %s751, 8
        %s753 = scalar_lea.vmem [#allocation17], %s752
        %s754 = ssub.s32 %s43, 1
        %p755 = scmp.gt.s32.totalorder %s754, 0
        %s756 = scalar_select %p755, %s754, 0
        %s757 = sadd.s32 %s43, 1
        %p758 = scmp.lt.s32.totalorder %s757, 1
        %s759 = scalar_select %p758, %s757, 1
        %s760 = ssub.s32 %s43, 1
        %p761 = scmp.gt.s32.totalorder %s760, 0
        %s762 = scalar_select %p761, %s760, 0
        %s763 = sadd.s32 %s43, 1
        %p764 = scmp.lt.s32.totalorder %s763, 1
        %s765 = scalar_select %p764, %s763, 1
        %s766 = ssub.s32 %s43, 1
        %p767 = scmp.gt.s32.totalorder %s766, 0
        %s768 = scalar_select %p767, %s766, 0
        %s769 = sadd.s32 %s43, 1
        %p770 = scmp.lt.s32.totalorder %s769, 1
        %s771 = scalar_select %p770, %s769, 1
        %p772 = scmp.gt.s32.totalorder %s43, 0
        %s773 = scalar_select %p772, 1, 0
        %s774 = scvt.s32.f32 %s773
        %p775 = scmp.lt.s32.totalorder %s43, 1
        %s776 = scalar_select %p775, 1, 0
        %s777 = scvt.s32.f32 %s776
        %v778 = vld [vmem:[%s598] sm:$0xff]
        %v779 = vld [vmem:[%s608 + $0x7] sm:$0x1]
        %v780 = vstv %s774
        %v781 = vmul.f32 %v779, %v780
        %v782 = vld [vmem:[%s618] sm:$0x1]
        %v783 = vstv %s777
        %v784 = vmul.f32 %v782, %v783
        %786 = vrot.lane.b32.xlu0 %v778, 1
        %v787 = vpop.permute.xlu0 %786
        %vm789 = vcmask 7168
        %v790 = vsel %vm789, 0.0, %v787
        %791 = vrot.lane.b32.xlu0 %v778, 127
        %v792 = vpop.permute.xlu0 %791
        %vm794 = vcmask 1039360
        %v795 = vsel %vm794, %v792, 0.0
        %v796 = vsub.f32 %v795, %v790
        %v797 = vmul.f32 %v778, 2.0
        %v798 = vadd.f32 %v790, %v797
        %v799 = vadd.f32 %v798, %v795
        %801 = vrot.lane.b32.xlu0 %v781, 1
        %v802 = vpop.permute.xlu0 %801
        %v804 = vsel %vm789, 0.0, %v802
        %805 = vrot.lane.b32.xlu0 %v781, 127
        %v806 = vpop.permute.xlu0 %805
        %v808 = vsel %vm794, %v806, 0.0
        %v809 = vsub.f32 %v808, %v804
        %v810 = vmul.f32 %v781, 2.0
        %v811 = vadd.f32 %v804, %v810
        %v812 = vadd.f32 %v811, %v808
        %814 = vrot.lane.b32.xlu0 %v784, 1
        %v815 = vpop.permute.xlu0 %814
        %v817 = vsel %vm789, 0.0, %v815
        %818 = vrot.lane.b32.xlu0 %v784, 127
        %v819 = vpop.permute.xlu0 %818
        %v821 = vsel %vm794, %v819, 0.0
        %v822 = vsub.f32 %v821, %v817
        %v823 = vmul.f32 %v784, 2.0
        %v824 = vadd.f32 %v817, %v823
        %v825 = vadd.f32 %v824, %v821
        %v826 = vmul.f32 %v796, 2.0
        %v828 = vrot.slane %v826, 1
        %v830 = vadd.f32 %v796, %v828
        %v832 = vrot.slane %v796, 2
        %v834 = vadd.f32 %v830, %v832
        %v835 = vand.u32 2147483647, %v834
        %v837 = vrot.slane %v799, 2
        %v839 = vsub.f32 %v799, %v837
        %v840 = vand.u32 2147483647, %v839
        %v841 = vadd.f32 %v835, %v840
        %v842 = vadd.f32 %v809, %v826
        %v843 = vrot.slane %v796, 1
        %v845 = vadd.f32 %v842, %v843
        %v846 = vand.u32 2147483647, %v845
        %v847 = vrot.slane %v799, 1
        %v849 = vsub.f32 %v812, %v847
        %v850 = vand.u32 2147483647, %v849
        %v851 = vadd.f32 %v846, %v850
        %v853 = vrot.slane %v822, 2
        %v855 = vadd.f32 %v830, %v853
        %v856 = vand.u32 2147483647, %v855
        %v858 = vrot.slane %v825, 2
        %v860 = vsub.f32 %v799, %v858
        %v861 = vand.u32 2147483647, %v860
        %v862 = vadd.f32 %v856, %v861
        %v863 = vld [vmem:[%s628] sm:$0xff]
        %v864 = vld [vmem:[%s638 + $0x7] sm:$0x1]
        %v865 = vmul.f32 %v864, %v780
        %v866 = vld [vmem:[%s648] sm:$0x1]
        %v867 = vmul.f32 %v866, %v783
        %869 = vrot.lane.b32.xlu0 %v863, 1
        %v870 = vpop.permute.xlu0 %869
        %v872 = vsel %vm789, 0.0, %v870
        %873 = vrot.lane.b32.xlu0 %v863, 127
        %v874 = vpop.permute.xlu0 %873
        %v876 = vsel %vm794, %v874, 0.0
        %v877 = vsub.f32 %v876, %v872
        %v878 = vmul.f32 %v863, 2.0
        %v879 = vadd.f32 %v872, %v878
        %v880 = vadd.f32 %v879, %v876
        %882 = vrot.lane.b32.xlu0 %v865, 1
        %v883 = vpop.permute.xlu0 %882
        %v885 = vsel %vm789, 0.0, %v883
        %886 = vrot.lane.b32.xlu0 %v865, 127
        %v887 = vpop.permute.xlu0 %886
        %v889 = vsel %vm794, %v887, 0.0
        %v890 = vsub.f32 %v889, %v885
        %v891 = vmul.f32 %v865, 2.0
        %v892 = vadd.f32 %v885, %v891
        %v893 = vadd.f32 %v892, %v889
        %895 = vrot.lane.b32.xlu0 %v867, 1
        %v896 = vpop.permute.xlu0 %895
        %v898 = vsel %vm789, 0.0, %v896
        %899 = vrot.lane.b32.xlu0 %v867, 127
        %v900 = vpop.permute.xlu0 %899
        %v902 = vsel %vm794, %v900, 0.0
        %v903 = vsub.f32 %v902, %v898
        %v904 = vmul.f32 %v867, 2.0
        %v905 = vadd.f32 %v898, %v904
        %v906 = vadd.f32 %v905, %v902
        %v907 = vmul.f32 %v877, 2.0
        %v909 = vrot.slane %v907, 1
        %v911 = vadd.f32 %v877, %v909
        %v913 = vrot.slane %v877, 2
        %v915 = vadd.f32 %v911, %v913
        %v916 = vand.u32 2147483647, %v915
        %v918 = vrot.slane %v880, 2
        %v920 = vsub.f32 %v880, %v918
        %v921 = vand.u32 2147483647, %v920
        %v922 = vadd.f32 %v916, %v921
        %v923 = vadd.f32 %v890, %v907
        %v924 = vrot.slane %v877, 1
        %v926 = vadd.f32 %v923, %v924
        %v927 = vand.u32 2147483647, %v926
        %v928 = vrot.slane %v880, 1
        %v930 = vsub.f32 %v893, %v928
        %v931 = vand.u32 2147483647, %v930
        %v932 = vadd.f32 %v927, %v931
        %v934 = vrot.slane %v903, 2
        %v936 = vadd.f32 %v911, %v934
        %v937 = vand.u32 2147483647, %v936
        %v939 = vrot.slane %v906, 2
        %v941 = vsub.f32 %v880, %v939
        %v942 = vand.u32 2147483647, %v941
        %v943 = vadd.f32 %v937, %v942
        %v944 = vld [vmem:[%s658] sm:$0xff]
        %v945 = vld [vmem:[%s668 + $0x7] sm:$0x1]
        %v946 = vmul.f32 %v945, %v780
        %v947 = vld [vmem:[%s678] sm:$0x1]
        %v948 = vmul.f32 %v947, %v783
        %950 = vrot.lane.b32.xlu0 %v944, 1
        %v951 = vpop.permute.xlu0 %950
        %v953 = vsel %vm789, 0.0, %v951
        %954 = vrot.lane.b32.xlu0 %v944, 127
        %v955 = vpop.permute.xlu0 %954
        %v957 = vsel %vm794, %v955, 0.0
        %v958 = vsub.f32 %v957, %v953
        %v959 = vmul.f32 %v944, 2.0
        %v960 = vadd.f32 %v953, %v959
        %v961 = vadd.f32 %v960, %v957
        %963 = vrot.lane.b32.xlu0 %v946, 1
        %v964 = vpop.permute.xlu0 %963
        %v966 = vsel %vm789, 0.0, %v964
        %967 = vrot.lane.b32.xlu0 %v946, 127
        %v968 = vpop.permute.xlu0 %967
        %v970 = vsel %vm794, %v968, 0.0
        %v971 = vsub.f32 %v970, %v966
        %v972 = vmul.f32 %v946, 2.0
        %v973 = vadd.f32 %v966, %v972
        %v974 = vadd.f32 %v973, %v970
        %976 = vrot.lane.b32.xlu0 %v948, 1
        %v977 = vpop.permute.xlu0 %976
        %v979 = vsel %vm789, 0.0, %v977
        %980 = vrot.lane.b32.xlu0 %v948, 127
        %v981 = vpop.permute.xlu0 %980
        %v983 = vsel %vm794, %v981, 0.0
        %v984 = vsub.f32 %v983, %v979
        %v985 = vmul.f32 %v948, 2.0
        %v986 = vadd.f32 %v979, %v985
        %v987 = vadd.f32 %v986, %v983
        %v988 = vmul.f32 %v958, 2.0
        %v990 = vrot.slane %v988, 1
        %v992 = vadd.f32 %v958, %v990
        %v994 = vrot.slane %v958, 2
        %v996 = vadd.f32 %v992, %v994
        %v997 = vand.u32 2147483647, %v996
        %v999 = vrot.slane %v961, 2
        %v1001 = vsub.f32 %v961, %v999
        %v1002 = vand.u32 2147483647, %v1001
        %v1003 = vadd.f32 %v997, %v1002
        %v1004 = vadd.f32 %v971, %v988
        %v1005 = vrot.slane %v958, 1
        %v1007 = vadd.f32 %v1004, %v1005
        %v1008 = vand.u32 2147483647, %v1007
        %v1009 = vrot.slane %v961, 1
        %v1011 = vsub.f32 %v974, %v1009
        %v1012 = vand.u32 2147483647, %v1011
        %v1013 = vadd.f32 %v1008, %v1012
        %v1015 = vrot.slane %v984, 2
        %v1017 = vadd.f32 %v992, %v1015
        %v1018 = vand.u32 2147483647, %v1017
        %v1020 = vrot.slane %v987, 2
        %v1022 = vsub.f32 %v961, %v1020
        %v1023 = vand.u32 2147483647, %v1022
        %v1024 = vadd.f32 %v1018, %v1023
        %v1025 = vmax.f32 %v841, %v922
        %v1026 = vsub.f32 %v1003, %v1025
        %v1027 = vand.u32 2147483647, %v1026
        %v1028 = vmax.f32 %v851, %v932
        %v1029 = vsub.f32 %v1013, %v1028
        %v1030 = vand.u32 2147483647, %v1029
        %v1031 = vmax.f32 %v862, %v943
        %v1032 = vsub.f32 %v1024, %v1031
        %v1033 = vand.u32 2147483647, %v1032
        %vm1034 = vcmask 1045504
        %v1035 = vsel %vm1034, %v1027, 0.0
        %v1036 = vrot.slane %v1035, 4
        %v1037 = vadd.f32 %v1035, %v1036
        %v1038 = vrot.slane %v1037, 2
        %v1039 = vadd.f32 %v1037, %v1038
        %v1040 = vrot.slane %v1039, 1
        %v1041 = vadd.f32 %v1039, %v1040
        %v1042 = vadd.f32 %v1041, %v1030
        %v1044 = vrot.slane %v1033, 6
        %v1046 = vadd.f32 %v1042, %v1044
        %v1047 = vlaneseq
        %v1048 = vand.u32 %v1047, 127
        %vm1049 = vcmp.lt.s32.totalorder %v1048, 16
        %v1050 = vsel %vm1049, 1, 0
        %v1051 = vcvt.s32.f32 %v1050
        %v1052 = vmul.f32 %v1046, %v1051
        %1053 = vst [vmem:[%s753] sm:$0xff] 0.0
        %1054 = vst [vmem:[%s753] sm:$0x1] %v1052
        %s1055 = sand.u32 %s348, 1
        %s1056 = scalar_lea.sflag [#allocation4], %s1055
        %s1057 = sand.u32 %s348, 1
        %s1058 = smul.addr %s1057, 8
        %s1059 = scalar_lea.vmem [#allocation17], %s1058
        // Predicated region
        $region93: #{tpu_custom_call.1} parent=55 // pred_check
          %p1060 = pneg %p358
        $region94: #{tpu_custom_call.1} parent=55 // pred_check_branch
          %1062 = sbr.rel (%p1060) target = $region96
        $region95: #{tpu_custom_call.1} parent=55 // pred_region
          %1064 = vsyncadd %s1056, 0
          %s1065 = smul.addr %s42, 2
          %s1066 = sadd.s32 %s43, %s1065
          %s1067 = smul.addr %s1066, 8
          %s1068 = scalar_lea.hbm %s9, %s1067
          %s1070 = sshll.u32 %s1059, 4
          %s1071 = int_to_ptr.vmem [resolvable:$true] %s1070
          %s1072 = sshll.u32 %s1068, 4
          %s1073 = int_to_ptr.hbm [resolvable:$true] %s1072
          %1075 = dma.vmem_to_hbm [thread:$0]  %s1071, 128, %s1073, %s1056
        $region96: #{tpu_custom_call.1} parent=55 // pred_fallthru
          _
      $region56: #{tpu_custom_call.1} parent=5 // pred_fallthru
        _
      %p1076 = scmp.le.s32.totalorder 2, %s33
      // Predicated region
      $region97: #{tpu_custom_call.1} parent=5 // pred_check
        %p1077 = pneg %p1076
      $region98: #{tpu_custom_call.1} parent=5 // pred_check_branch
        %1079 = sbr.rel (%p1077) target = $region100
      $region99: #{tpu_custom_call.1} parent=5 // pred_region
        %s1080 = ssub.s32 %s33, 2
        // Predicated region
        $region101: #{tpu_custom_call.1} parent=99 // pred_check
          %p1081 = pneg %p364
        $region102: #{tpu_custom_call.1} parent=99 // pred_check_branch
          %1083 = sbr.rel (%p1081) target = $region104
        $region103: #{tpu_custom_call.1} parent=99 // pred_region
          %s1084 = sand.u32 %s349, 1
          %s1085 = scalar_lea.sflag [#allocation4], %s1084
          %s1086 = sand.u32 %s349, 1
          %s1087 = smul.addr %s1086, 8
          %s1088 = scalar_lea.vmem [#allocation17], %s1087
          %1090 = dma.done %s1085, 128
        $region104: #{tpu_custom_call.1} parent=99 // pred_fallthru
          _
      $region100: #{tpu_custom_call.1} parent=5 // pred_fallthru
        _
    $region6: #{tpu_custom_call.1} parent=1 // loop_footer
      %s37 = sadd.s32 1, %s33
    $region7: #{tpu_custom_call.1} parent=1 // loop_footer_branch
      %32 = sbr.rel target = $region3
    $region8: #{tpu_custom_call.1} parent=1 // loop_exit
      _
    %1091 = vsyncpa [#allocation3], 1
    %s1092 = scalar_lea.sflag [#allocation3], 1
    %1093 = vsyncpa %s1092, 1
    %1094 = vsyncpa [#allocation6], 1
    %s1095 = scalar_lea.sflag [#allocation6], 1
    %1096 = vsyncpa %s1095, 1
    %1097 = vsyncpa [#allocation9], 1
    %s1098 = scalar_lea.sflag [#allocation9], 1
    %1099 = vsyncpa %s1098, 1
    %1100 = vsyncpa [#allocation12], 1
    %s1101 = scalar_lea.sflag [#allocation12], 1
    %1102 = vsyncpa %s1101, 1
    %1103 = vsyncpa [#allocation15], 1
    %s1104 = scalar_lea.sflag [#allocation15], 1
    %1105 = vsyncpa %s1104, 1
    %1106 = vsyncpa [#allocation4], 1
    %s1107 = scalar_lea.sflag [#allocation4], 1
    %1108 = vsyncpa %s1107, 1

</llo_original>
